<compile_context>
chip_gen: v5e
topology: v5e:2x2
jax: 0.10.0
libtpu: 0.0.40
codegen_flags: <defaults>
</compile_context>

<pallas_src>
import functools

import jax
import jax.numpy as jnp
from jax import lax
from jax.experimental import pallas as pl
from jax.experimental.pallas import tpu as pltpu

# ---------------- small synthetic config (mirrors module defaults, shrunk) ---
D_MODEL = 128
NUM_HEADS = 4            # head_dim = 32
FFN_HID = 256
NUM_LAYERS = 2
MAX_SEQ_LEN = 16
VOCAB = 256
LN_EPS = 1e-12
PAD_IDX = 0
V_TILE = 128             # vocab tile of the tied output head (lane-dense)


# ---------------------------- kernel helpers --------------------------------
def _layer_norm(x, w, b, eps=LN_EPS):
    mu = jnp.mean(x, axis=-1, keepdims=True)
    var = jnp.mean((x - mu) ** 2, axis=-1, keepdims=True)
    return (x - mu) * lax.rsqrt(var + eps) * w + b


# --------------------------- layer-stack kernel ------------------------------
def layer_stack_kernel(B, S, H,
                       h0_ref,                                  # (BS, D) f32
                       ln_ref, wqkv_ref, bqkv_ref, wo_ref, bo_ref,
                       w1_ref, b1_ref, w2_ref, b2_ref,
                       h_ref,                                   # OUT (BS, D) f32
                       attn_ref):                               # VMEM (BS, D) f32
    l = pl.program_id(0)
    D = h0_ref.shape[1]
    hd = D // H
    BS = B * S

    # ---- layer 0: copy the (already gathered) embedding+pos activation ------
    @pl.when(l == 0)
    def _init():
        h_ref[...] = h0_ref[...]
        # nn.Dropout after the embedding is identity in eval mode.

    # ------------------------------ layer l ----------------------------------
    x = h_ref[...]                                           # (BS, D) f32, resident
    ln = ln_ref[0]                                           # (4, D): w1,b1,w2,b2
    x_ln = _layer_norm(x, ln[0:1, :], ln[1:2, :])

    # fused QKV projection; 1/sqrt(hd) is already folded into the q columns.
    qkv = jnp.dot(x_ln.astype(jnp.bfloat16), wqkv_ref[0],
                  preferred_element_type=jnp.float32) + bqkv_ref[0]   # (BS, 3D) f32

    # head-batched layout: (H*B, S, hd) via axis-0 concat of static head slices
    def to_head_batch(base):
        return jnp.concatenate(
            [qkv[:, base + h * hd: base + (h + 1) * hd].reshape(B, S, hd)
             for h in range(H)], axis=0).astype(jnp.bfloat16)
    q_hb = to_head_batch(0)
    k_hb = to_head_batch(D)
    v_hb = to_head_batch(2 * D)

    # additive causal mask (triu, diagonal=1), kept in f32
    row_i = lax.broadcasted_iota(jnp.int32, (S, S), 0)
    col_i = lax.broadcasted_iota(jnp.int32, (S, S), 1)
    neg = jnp.where(col_i > row_i, jnp.float32(-1e30), jnp.float32(0.0))

    # one batched score einsum + one softmax + one batched PV einsum
    s = jnp.einsum('bqd,bkd->bqk', q_hb, k_hb,
                   preferred_element_type=jnp.float32) + neg          # (HB, S, S)
    s = s - jnp.max(s, axis=-1, keepdims=True)
    p = jnp.exp(s)
    p = p * pl.reciprocal(jnp.sum(p, axis=-1, keepdims=True), approx=True)
    o = jnp.einsum('bqk,bkd->bqd', p.astype(jnp.bfloat16), v_hb,
                   preferred_element_type=jnp.float32)                # (HB, S, hd)

    # assemble head outputs into (BS, D) and do ONE full-K output projection
    for h in range(H):
        attn_ref[:, h * hd:(h + 1) * hd] = o[h * B:(h + 1) * B].reshape(BS, hd)
    attn = jnp.dot(attn_ref[...].astype(jnp.bfloat16), wo_ref[0],
                   preferred_element_type=jnp.float32) + bo_ref[0]
    # attention / residual dropouts are identity in eval mode.

    # NOTE: residuals are added onto the LayerNorm outputs, exactly as the
    # torch module does (it overwrites x with ln_1(x) / ln_2(x) before adding).
    x2 = attn + x_ln
    x_ln2 = _layer_norm(x2, ln[2:3, :], ln[3:4, :])

    h1 = jnp.maximum(jnp.dot(x_ln2.astype(jnp.bfloat16), w1_ref[0],
                             preferred_element_type=jnp.float32) + b1_ref[0], 0.0)
    ff = jnp.dot(h1.astype(jnp.bfloat16), w2_ref[0],
                 preferred_element_type=jnp.float32) + b2_ref[0]

    h_ref[...] = ff + x_ln2


# ------------------------ tied output-head kernel ----------------------------
def head_kernel(h_ref, embed_t_ref, logits_ref):
    # (BS, D) @ (D, V_TILE) — no transpose, table already bf16 and (D, V)
    logits_ref[...] = jnp.dot(h_ref[...].astype(jnp.bfloat16), embed_t_ref[...],
                              preferred_element_type=jnp.float32)


# ------------------------------ wrapper --------------------------------------
def transformer_lm_forward(tokens, params):
    B, S = tokens.shape
    BS = B * S
    D, F, V, L, H = D_MODEL, FFN_HID, VOCAB, NUM_LAYERS, NUM_HEADS
    hd = D // H

    # Input layer: vectorized XLA embedding gather + positional add (no
    # per-row scalar loop inside the kernel).
    h0 = (params["embed"][tokens] + params["pos"][None, :S, :]).reshape(BS, D)

    # Parameter prep: fold the 1/sqrt(hd) attention scale into Wq's columns.
    scale = 1.0 / float(hd) ** 0.5
    wqkv = params["wqkv"].astype(jnp.float32)
    wqkv = wqkv.at[:, :, :D].multiply(scale).astype(jnp.bfloat16)

    grid_spec = pltpu.PrefetchScalarGridSpec(
        num_scalar_prefetch=0,
        grid=(L,),
        in_specs=[
            pl.BlockSpec((BS, D), lambda l: (0, 0)),               # h0 (f32)
            pl.BlockSpec((1, 4, D), lambda l: (l, 0, 0)),          # ln params
            pl.BlockSpec((1, D, 3 * D), lambda l: (l, 0, 0)),      # Wqkv (bf16)
            pl.BlockSpec((1, 1, 3 * D), lambda l: (l, 0, 0)),      # bqkv
            pl.BlockSpec((1, D, D), lambda l: (l, 0, 0)),          # Wo   (bf16)
            pl.BlockSpec((1, 1, D), lambda l: (l, 0, 0)),          # bo
            pl.BlockSpec((1, D, F), lambda l: (l, 0, 0)),          # W1   (bf16)
            pl.BlockSpec((1, 1, F), lambda l: (l, 0, 0)),          # b1
            pl.BlockSpec((1, F, D), lambda l: (l, 0, 0)),          # W2   (bf16)
            pl.BlockSpec((1, 1, D), lambda l: (l, 0, 0)),          # b2
        ],
        # constant block index across l -> activation stays resident in VMEM
        out_specs=pl.BlockSpec((BS, D), lambda l: (0, 0)),
        scratch_shapes=[pltpu.VMEM((BS, D), jnp.float32)],         # head concat buf
    )

    hidden = pl.pallas_call(
        functools.partial(layer_stack_kernel, B, S, H),
        grid_spec=grid_spec,
        out_shape=jax.ShapeDtypeStruct((BS, D), jnp.float32),
        compiler_params=pltpu.CompilerParams(
            dimension_semantics=("arbitrary",),        # layer axis is sequential
            vmem_limit_bytes=32 * 1024 * 1024),
    )(h0, params["ln"], wqkv, params["bqkv"], params["wo"], params["bo"],
      params["w1"], params["b1"], params["w2"], params["b2"])

    # Tied output head: pre-transposed bf16 (D, V) table, vocab-tiled,
    # "parallel" grid axis (second TC on v7x; scales to real vocab sizes).
    embed_t = params["embed"].T.astype(jnp.bfloat16)               # (D, V)
    logits = pl.pallas_call(
        head_kernel,
        grid=(V // V_TILE,),
        in_specs=[pl.BlockSpec((BS, D), lambda v: (0, 0)),
                  pl.BlockSpec((D, V_TILE), lambda v: (0, v))],
        out_specs=pl.BlockSpec((BS, V_TILE), lambda v: (0, v)),    # lane-dense
        out_shape=jax.ShapeDtypeStruct((BS, V), jnp.float32),
        compiler_params=pltpu.CompilerParams(
            dimension_semantics=("parallel",)),
    )(hidden, embed_t)
    return logits.reshape(B, S, V)


# ------------------------------ parameter init -------------------------------
def init_params(key):
    keys = jax.random.split(key, 2 + NUM_LAYERS)
    embed = 0.02 * jax.random.normal(keys[0], (VOCAB, D_MODEL), jnp.float32)
    embed = embed.at[PAD_IDX].set(0.0)            # nn.Embedding padding_idx row
    pos = 0.02 * jax.random.normal(keys[1], (MAX_SEQ_LEN, D_MODEL), jnp.float32)

    def lin(k, din, dout):
        return jax.random.normal(k, (din, dout), jnp.float32) / jnp.sqrt(
            jnp.float32(din))

    ln_l, wqkv_l, bqkv_l, wo_l, bo_l, w1_l, b1_l, w2_l, b2_l = ([] for _ in range(9))
    for li in range(NUM_LAYERS):
        lk = jax.random.split(keys[2 + li], 6)
        wq, wk, wv = lin(lk[0], D_MODEL, D_MODEL), lin(lk[1], D_MODEL, D_MODEL), \
            lin(lk[2], D_MODEL, D_MODEL)
        ln_l.append(jnp.stack([jnp.ones((D_MODEL,), jnp.float32),
                               jnp.zeros((D_MODEL,), jnp.float32),
                               jnp.ones((D_MODEL,), jnp.float32),
                               jnp.zeros((D_MODEL,), jnp.float32)]))
        wqkv_l.append(jnp.concatenate([wq, wk, wv], axis=1))
        bqkv_l.append(jnp.zeros((1, 3 * D_MODEL), jnp.float32))
        wo_l.append(lin(lk[3], D_MODEL, D_MODEL))
        bo_l.append(jnp.zeros((1, D_MODEL), jnp.float32))
        w1_l.append(lin(lk[4], D_MODEL, FFN_HID))
        b1_l.append(0.01 * jnp.ones((1, FFN_HID), jnp.float32))
        w2_l.append(lin(lk[5], FFN_HID, D_MODEL))
        b2_l.append(jnp.zeros((1, D_MODEL), jnp.float32))

    return dict(
        embed=embed, pos=pos,
        ln=jnp.stack(ln_l),                                  # (L, 4, D)  f32
        wqkv=jnp.stack(wqkv_l).astype(jnp.bfloat16),         # (L, D, 3D) bf16
        bqkv=jnp.stack(bqkv_l),
        wo=jnp.stack(wo_l).astype(jnp.bfloat16),
        bo=jnp.stack(bo_l),
        w1=jnp.stack(w1_l).astype(jnp.bfloat16),
        b1=jnp.stack(b1_l),
        w2=jnp.stack(w2_l).astype(jnp.bfloat16),
        b2=jnp.stack(b2_l),
    )


# --------------------------- pure-JAX reference ------------------------------
def _ref_ln(x, w, b, eps=LN_EPS):
    mu = jnp.mean(x, axis=-1, keepdims=True)
    var = jnp.mean((x - mu) ** 2, axis=-1, keepdims=True)
    return (x - mu) / jnp.sqrt(var + eps) * w + b


def reference_forward(tokens, params):
    B, S = tokens.shape
    D, H = D_MODEL, NUM_HEADS
    hd = D // H
    h = params["embed"][tokens] + params["pos"][:S][None, :, :]
    mask = jnp.where(jnp.arange(S)[None, :] > jnp.arange(S)[:, None],
                     jnp.float32(-1e30), jnp.float32(0.0))
    for li in range(NUM_LAYERS):
        ln = params["ln"][li]
        wqkv = params["wqkv"][li].astype(jnp.float32)
        wo = params["wo"][li].astype(jnp.float32)
        w1 = params["w1"][li].astype(jnp.float32)
        w2 = params["w2"][li].astype(jnp.float32)
        x = _ref_ln(h, ln[0], ln[1])
        qkv = x @ wqkv + params["bqkv"][li]
        q, k, v = qkv[..., :D], qkv[..., D:2 * D], qkv[..., 2 * D:]
        q = q.reshape(B, S, H, hd).transpose(0, 2, 1, 3) / jnp.sqrt(jnp.float32(hd))
        k = k.reshape(B, S, H, hd).transpose(0, 2, 1, 3)
        v = v.reshape(B, S, H, hd).transpose(0, 2, 1, 3)
        s = q @ jnp.swapaxes(k, -1, -2) + mask
        p = jax.nn.softmax(s, axis=-1)
        o = (p @ v).transpose(0, 2, 1, 3).reshape(B, S, D)
        x = o @ wo + params["bo"][li] + x
        x2 = _ref_ln(x, ln[2], ln[3])
        ff = jnp.maximum(x2 @ w1 + params["b1"][li], 0.0) @ w2 + params["b2"][li]
        h = ff + x2
    return h @ params["embed"].T


# ----------------------------------- main ------------------------------------
if __name__ == "__main__":
    key = jax.random.PRNGKey(0)
    pkey, tkey = jax.random.split(key)
    params = init_params(pkey)

    B, S = 2, 8
    tokens = jax.random.randint(tkey, (B, S), 0, VOCAB, dtype=jnp.int32)

    fwd = jax.jit(transformer_lm_forward)
    logits = jax.block_until_ready(fwd(tokens, params))

    assert logits.shape == (B, S, VOCAB), logits.shape
    assert bool(jnp.all(jnp.isfinite(logits)))

    ref = reference_forward(tokens, params)
    max_err = float(jnp.max(jnp.abs(logits - ref)))
    assert max_err < 1e-1, f"max abs error vs reference: {max_err}"

    print("KERNEL_OK")
</pallas_src>

<mosaic_0001>
module attributes {stable_mosaic.version = 11 : i64} {
  func.func @head_kernel(%arg0: i32, %arg1: memref<16x128xf32, #tpu.memory_space<vmem>>, %arg2: memref<128x128xbf16, #tpu.memory_space<vmem>>, %arg3: memref<16x128xf32, #tpu.memory_space<vmem>>) attributes {dimension_semantics = [#tpu.dimension_semantics<parallel>], iteration_bounds = array<i64: 2>, scalar_prefetch = 0 : i64, scratch_operands = 0 : i64, tpu.core_type = #tpu.core_type<tc>, window_params = [{pipeline_mode = #tpu.pipeline_mode<synchronous>, transform_indices = @transform_0, window_bounds = array<i64: 16, 128>}, {transform_indices = @transform_1, window_bounds = array<i64: 128, 128>}, {transform_indices = @transform_2, window_bounds = array<i64: 16, 128>}]} {
    %c0 = arith.constant 0 : index
    %c0_0 = arith.constant 0 : index
    %0 = vector.load %arg1[%c0, %c0_0] : memref<16x128xf32, #tpu.memory_space<vmem>>, vector<16x128xf32>
    %1 = arith.truncf %0 : vector<16x128xf32> to vector<16x128xbf16>
    %c0_1 = arith.constant 0 : index
    %c0_2 = arith.constant 0 : index
    %2 = vector.load %arg2[%c0_1, %c0_2] : memref<128x128xbf16, #tpu.memory_space<vmem>>, vector<128x128xbf16>
    %cst = arith.constant dense<0.000000e+00> : vector<16x128xf32>
    %3 = tpu.matmul %1, %2, %cst {dimension_numbers = #tpu.dot_dimension_numbers<[1], [0], [0], [1], [0, 0, 1, 1], [], []>} : vector<16x128xbf16>, vector<128x128xbf16>, vector<16x128xf32> -> vector<16x128xf32>
    %c0_3 = arith.constant 0 : index
    %c0_4 = arith.constant 0 : index
    %4 = vector.load %arg3[%c0_3, %c0_4] : memref<16x128xf32, #tpu.memory_space<vmem>>, vector<16x128xf32>
    tpu.vector_store %arg3[%c0_3, %c0_4], %3 {strides = array<i32>} : memref<16x128xf32, #tpu.memory_space<vmem>>, vector<16x128xf32>,
    return
  }
  func.func @transform_0(%arg0: i32) -> (i32, i32) {
    %c0_i32 = arith.constant 0 : i32
    %c0_i32_0 = arith.constant 0 : i32
    %c0_i32_1 = arith.constant 0 : i32
    return %c0_i32, %c0_i32_0 : i32, i32
  }
  func.func @transform_1(%arg0: i32) -> (i32, i32) {
    %c0_i32 = arith.constant 0 : i32
    %c0_i32_0 = arith.constant 0 : i32
    return %c0_i32, %arg0 : i32, i32
  }
  func.func @transform_2(%arg0: i32) -> (i32, i32) {
    %c0_i32 = arith.constant 0 : i32
    %c0_i32_0 = arith.constant 0 : i32
    return %c0_i32, %arg0 : i32, i32
  }
}

module attributes {stable_mosaic.version = 11 : i64} {
  func.func @layer_stack_kernel(%arg0: i32, %arg1: memref<16x128xf32, #tpu.memory_space<vmem>>, %arg2: memref<1x4x128xf32, #tpu.memory_space<vmem>>, %arg3: memref<1x128x384xbf16, #tpu.memory_space<vmem>>, %arg4: memref<1x1x384xf32, #tpu.memory_space<vmem>>, %arg5: memref<1x128x128xbf16, #tpu.memory_space<vmem>>, %arg6: memref<1x1x128xf32, #tpu.memory_space<vmem>>, %arg7: memref<1x128x256xbf16, #tpu.memory_space<vmem>>, %arg8: memref<1x1x256xf32, #tpu.memory_space<vmem>>, %arg9: memref<1x256x128xbf16, #tpu.memory_space<vmem>>, %arg10: memref<1x1x128xf32, #tpu.memory_space<vmem>>, %arg11: memref<16x128xf32, #tpu.memory_space<vmem>>, %arg12: memref<16x128xf32, #tpu.memory_space<vmem>>) attributes {dimension_semantics = [#tpu.dimension_semantics<arbitrary>], iteration_bounds = array<i64: 2>, scalar_prefetch = 0 : i64, scratch_operands = 1 : i64, tpu.core_type = #tpu.core_type<tc>, window_params = [{pipeline_mode = #tpu.pipeline_mode<synchronous>, transform_indices = @transform_0, window_bounds = array<i64: 16, 128>}, {transform_indices = @transform_1, window_bounds = array<i64: 1, 4, 128>}, {transform_indices = @transform_2, window_bounds = array<i64: 1, 128, 384>}, {transform_indices = @transform_3, window_bounds = array<i64: 1, 1, 384>}, {transform_indices = @transform_4, window_bounds = array<i64: 1, 128, 128>}, {transform_indices = @transform_5, window_bounds = array<i64: 1, 1, 128>}, {transform_indices = @transform_6, window_bounds = array<i64: 1, 128, 256>}, {transform_indices = @transform_7, window_bounds = array<i64: 1, 1, 256>}, {transform_indices = @transform_8, window_bounds = array<i64: 1, 256, 128>}, {transform_indices = @transform_9, window_bounds = array<i64: 1, 1, 128>}, {pipeline_mode = #tpu.pipeline_mode<synchronous>, transform_indices = @transform_10, window_bounds = array<i64: 16, 128>}]} {
    %c0_i32 = arith.constant 0 : i32
    %0 = arith.cmpi eq, %arg0, %c0_i32 : i32
    %1 = arith.extui %0 : i1 to i32
    %c0_i32_0 = arith.constant 0 : i32
    %2 = arith.cmpi ne, %1, %c0_i32_0 : i32
    scf.if %2 {
      %c0_58 = arith.constant 0 : index
      %c0_59 = arith.constant 0 : index
      %156 = vector.load %arg1[%c0_58, %c0_59] : memref<16x128xf32, #tpu.memory_space<vmem>>, vector<16x128xf32>
      %c0_60 = arith.constant 0 : index
      %c0_61 = arith.constant 0 : index
      %157 = vector.load %arg11[%c0_60, %c0_61] : memref<16x128xf32, #tpu.memory_space<vmem>>, vector<16x128xf32>
      tpu.vector_store %arg11[%c0_60, %c0_61], %156 {strides = array<i32>} : memref<16x128xf32, #tpu.memory_space<vmem>>, vector<16x128xf32>,
    } else {
    }
    %c0 = arith.constant 0 : index
    %c0_1 = arith.constant 0 : index
    %3 = vector.load %arg11[%c0, %c0_1] : memref<16x128xf32, #tpu.memory_space<vmem>>, vector<16x128xf32>
    %c0_2 = arith.constant 0 : index
    %c0_3 = arith.constant 0 : index
    %c0_4 = arith.constant 0 : index
    %4 = vector.load %arg2[%c0_2, %c0_3, %c0_4] : memref<1x4x128xf32, #tpu.memory_space<vmem>>, vector<1x4x128xf32>
    %5 = vector.shape_cast %4 : vector<1x4x128xf32> to vector<4x128xf32>
    %6 = vector.extract_strided_slice %5 {offsets = [0, 0], sizes = [1, 128], strides = [1, 1]} : vector<4x128xf32> to vector<1x128xf32>
    %7 = vector.extract_strided_slice %5 {offsets = [1, 0], sizes = [1, 128], strides = [1, 1]} : vector<4x128xf32> to vector<1x128xf32>
    %cst = arith.constant dense<0.000000e+00> : vector<16xf32>
    %8 = vector.multi_reduction <add>, %3, %cst [1] : vector<16x128xf32> to vector<16xf32>
    %9 = vector.shape_cast %8 : vector<16xf32> to vector<16x1xf32>
    %cst_5 = arith.constant 1.280000e+02 : f32
    %10 = vector.broadcast %cst_5 : f32 to vector<16x1xf32>
    %11 = arith.divf %9, %10 : vector<16x1xf32>
    %12 = vector.broadcast %11 : vector<16x1xf32> to vector<16x128xf32>
    %13 = arith.subf %3, %12 : vector<16x128xf32>
    %14 = arith.mulf %13, %13 : vector<16x128xf32>
    %cst_6 = arith.constant dense<0.000000e+00> : vector<16xf32>
    %15 = vector.multi_reduction <add>, %14, %cst_6 [1] : vector<16x128xf32> to vector<16xf32>
    %16 = vector.shape_cast %15 : vector<16xf32> to vector<16x1xf32>
    %cst_7 = arith.constant 1.280000e+02 : f32
    %17 = vector.broadcast %cst_7 : f32 to vector<16x1xf32>
    %18 = arith.divf %16, %17 : vector<16x1xf32>
    %19 = vector.broadcast %11 : vector<16x1xf32> to vector<16x128xf32>
    %20 = arith.subf %3, %19 : vector<16x128xf32>
    %cst_8 = arith.constant 9.99999996E-13 : f32
    %21 = vector.broadcast %cst_8 : f32 to vector<16x1xf32>
    %22 = arith.addf %18, %21 : vector<16x1xf32>
    %23 = math.rsqrt %22 : vector<16x1xf32>
    %24 = vector.broadcast %23 : vector<16x1xf32> to vector<16x128xf32>
    %25 = arith.mulf %20, %24 : vector<16x128xf32>
    %26 = vector.broadcast %6 : vector<1x128xf32> to vector<16x128xf32>
    %27 = arith.mulf %25, %26 : vector<16x128xf32>
    %28 = vector.broadcast %7 : vector<1x128xf32> to vector<16x128xf32>
    %29 = arith.addf %27, %28 : vector<16x128xf32>
    %30 = arith.truncf %29 : vector<16x128xf32> to vector<16x128xbf16>
    %c0_9 = arith.constant 0 : index
    %c0_10 = arith.constant 0 : index
    %c0_11 = arith.constant 0 : index
    %31 = vector.load %arg3[%c0_9, %c0_10, %c0_11] : memref<1x128x384xbf16, #tpu.memory_space<vmem>>, vector<1x128x384xbf16>
    %32 = vector.shape_cast %31 : vector<1x128x384xbf16> to vector<128x384xbf16>
    %cst_12 = arith.constant dense<0.000000e+00> : vector<16x384xf32>
    %33 = tpu.matmul %30, %32, %cst_12 {dimension_numbers = #tpu.dot_dimension_numbers<[1], [0], [0], [1], [0, 0, 1, 1], [], []>} : vector<16x128xbf16>, vector<128x384xbf16>, vector<16x384xf32> -> vector<16x384xf32>
    %c0_13 = arith.constant 0 : index
    %c0_14 = arith.constant 0 : index
    %c0_15 = arith.constant 0 : index
    %34 = vector.load %arg4[%c0_13, %c0_14, %c0_15] : memref<1x1x384xf32, #tpu.memory_space<vmem>>, vector<1x1x384xf32>
    %35 = vector.shape_cast %34 : vector<1x1x384xf32> to vector<1x384xf32>
    %36 = vector.broadcast %35 : vector<1x384xf32> to vector<16x384xf32>
    %37 = arith.addf %33, %36 : vector<16x384xf32>
    %38 = vector.extract_strided_slice %37 {offsets = [0, 0], sizes = [16, 32], strides = [1, 1]} : vector<16x384xf32> to vector<16x32xf32>
    %39 = vector.shape_cast %38 : vector<16x32xf32> to vector<2x8x32xf32>
    %40 = vector.extract_strided_slice %37 {offsets = [0, 32], sizes = [16, 32], strides = [1, 1]} : vector<16x384xf32> to vector<16x32xf32>
    %41 = vector.shape_cast %40 : vector<16x32xf32> to vector<2x8x32xf32>
    %42 = vector.extract_strided_slice %37 {offsets = [0, 64], sizes = [16, 32], strides = [1, 1]} : vector<16x384xf32> to vector<16x32xf32>
    %43 = vector.shape_cast %42 : vector<16x32xf32> to vector<2x8x32xf32>
    %44 = vector.extract_strided_slice %37 {offsets = [0, 96], sizes = [16, 32], strides = [1, 1]} : vector<16x384xf32> to vector<16x32xf32>
    %45 = vector.shape_cast %44 : vector<16x32xf32> to vector<2x8x32xf32>
    %46 = tpu.concatenate %39, %41, %43, %45 in 0 : vector<2x8x32xf32>, vector<2x8x32xf32>, vector<2x8x32xf32>, vector<2x8x32xf32> -> vector<8x8x32xf32>
    %47 = arith.truncf %46 : vector<8x8x32xf32> to vector<8x8x32xbf16>
    %48 = vector.extract_strided_slice %37 {offsets = [0, 128], sizes = [16, 32], strides = [1, 1]} : vector<16x384xf32> to vector<16x32xf32>
    %49 = vector.shape_cast %48 : vector<16x32xf32> to vector<2x8x32xf32>
    %50 = vector.extract_strided_slice %37 {offsets = [0, 160], sizes = [16, 32], strides = [1, 1]} : vector<16x384xf32> to vector<16x32xf32>
    %51 = vector.shape_cast %50 : vector<16x32xf32> to vector<2x8x32xf32>
    %52 = vector.extract_strided_slice %37 {offsets = [0, 192], sizes = [16, 32], strides = [1, 1]} : vector<16x384xf32> to vector<16x32xf32>
    %53 = vector.shape_cast %52 : vector<16x32xf32> to vector<2x8x32xf32>
    %54 = vector.extract_strided_slice %37 {offsets = [0, 224], sizes = [16, 32], strides = [1, 1]} : vector<16x384xf32> to vector<16x32xf32>
    %55 = vector.shape_cast %54 : vector<16x32xf32> to vector<2x8x32xf32>
    %56 = tpu.concatenate %49, %51, %53, %55 in 0 : vector<2x8x32xf32>, vector<2x8x32xf32>, vector<2x8x32xf32>, vector<2x8x32xf32> -> vector<8x8x32xf32>
    %57 = arith.truncf %56 : vector<8x8x32xf32> to vector<8x8x32xbf16>
    %58 = vector.extract_strided_slice %37 {offsets = [0, 256], sizes = [16, 32], strides = [1, 1]} : vector<16x384xf32> to vector<16x32xf32>
    %59 = vector.shape_cast %58 : vector<16x32xf32> to vector<2x8x32xf32>
    %60 = vector.extract_strided_slice %37 {offsets = [0, 288], sizes = [16, 32], strides = [1, 1]} : vector<16x384xf32> to vector<16x32xf32>
    %61 = vector.shape_cast %60 : vector<16x32xf32> to vector<2x8x32xf32>
    %62 = vector.extract_strided_slice %37 {offsets = [0, 320], sizes = [16, 32], strides = [1, 1]} : vector<16x384xf32> to vector<16x32xf32>
    %63 = vector.shape_cast %62 : vector<16x32xf32> to vector<2x8x32xf32>
    %64 = vector.extract_strided_slice %37 {offsets = [0, 352], sizes = [16, 32], strides = [1, 1]} : vector<16x384xf32> to vector<16x32xf32>
    %65 = vector.shape_cast %64 : vector<16x32xf32> to vector<2x8x32xf32>
    %66 = tpu.concatenate %59, %61, %63, %65 in 0 : vector<2x8x32xf32>, vector<2x8x32xf32>, vector<2x8x32xf32>, vector<2x8x32xf32> -> vector<8x8x32xf32>
    %67 = arith.truncf %66 : vector<8x8x32xf32> to vector<8x8x32xbf16>
    %68 = tpu.iota {dimensions = array<i32: 0>} : vector<8x8xi32>
    %69 = tpu.iota {dimensions = array<i32: 1>} : vector<8x8xi32>
    %70 = arith.cmpi sgt, %69, %68 : vector<8x8xi32>
    %cst_16 = arith.constant -1.000000e+30 : f32
    %cst_17 = arith.constant 0.000000e+00 : f32
    %71 = vector.broadcast %cst_16 : f32 to vector<8x8xf32>
    %72 = vector.broadcast %cst_17 : f32 to vector<8x8xf32>
    %73 = arith.select %70, %71, %72 : vector<8x8xi1>, vector<8x8xf32>
    "tpu.trace_start"() <{level = 10 : i32, message = "bqd,bkd->bqk"}> : () -> ()
    %cst_18 = arith.constant dense<0.000000e+00> : vector<8x8x8xf32>
    %74 = tpu.matmul %47, %57, %cst_18 {dimension_numbers = #tpu.dot_dimension_numbers<[2], [2], [1], [1], [0, 0, 0, 1, 1, 1], [0], [0]>} : vector<8x8x32xbf16>, vector<8x8x32xbf16>, vector<8x8x8xf32> -> vector<8x8x8xf32>
    "tpu.trace_stop"() : () -> ()
    %75 = vector.shape_cast %73 : vector<8x8xf32> to vector<1x8x8xf32>
    %76 = vector.broadcast %75 : vector<1x8x8xf32> to vector<8x8x8xf32>
    %77 = arith.addf %74, %76 : vector<8x8x8xf32>
    %cst_19 = arith.constant dense<0xFF800000> : vector<8x8xf32>
    %78 = vector.multi_reduction <maximumf>, %77, %cst_19 [2] : vector<8x8x8xf32> to vector<8x8xf32>
    %79 = vector.shape_cast %78 : vector<8x8xf32> to vector<8x8x1xf32>
    %80 = vector.broadcast %79 : vector<8x8x1xf32> to vector<8x8x8xf32>
    %81 = arith.subf %77, %80 : vector<8x8x8xf32>
    %82 = math.exp %81 : vector<8x8x8xf32>
    %cst_20 = arith.constant dense<0.000000e+00> : vector<8x8xf32>
    %83 = vector.multi_reduction <add>, %82, %cst_20 [2] : vector<8x8x8xf32> to vector<8x8xf32>
    %84 = vector.shape_cast %83 : vector<8x8xf32> to vector<8x8x1xf32>
    %85 = tpu.reciprocal %84 {approx = true} : vector<8x8x1xf32> -> vector<8x8x1xf32>
    %86 = vector.broadcast %85 : vector<8x8x1xf32> to vector<8x8x8xf32>
    %87 = arith.mulf %82, %86 : vector<8x8x8xf32>
    %88 = arith.truncf %87 : vector<8x8x8xf32> to vector<8x8x8xbf16>
    "tpu.trace_start"() <{level = 10 : i32, message = "bqk,bkd->bqd"}> : () -> ()
    %cst_21 = arith.constant dense<0.000000e+00> : vector<8x8x32xf32>
    %89 = tpu.matmul %88, %67, %cst_21 {dimension_numbers = #tpu.dot_dimension_numbers<[2], [1], [1], [2], [0, 0, 0, 1, 1, 2], [0], [0]>} : vector<8x8x8xbf16>, vector<8x8x32xbf16>, vector<8x8x32xf32> -> vector<8x8x32xf32>
    "tpu.trace_stop"() : () -> ()
    %90 = vector.extract_strided_slice %89 {offsets = [0, 0, 0], sizes = [2, 8, 32], strides = [1, 1, 1]} : vector<8x8x32xf32> to vector<2x8x32xf32>
    %91 = vector.shape_cast %90 : vector<2x8x32xf32> to vector<16x32xf32>
    %c0_22 = arith.constant 0 : index
    %c0_23 = arith.constant 0 : index
    %92 = vector.load %arg12[%c0_22, %c0_23] : memref<16x128xf32, #tpu.memory_space<vmem>>, vector<16x32xf32>
    tpu.vector_store %arg12[%c0_22, %c0_23], %91 {strides = array<i32>} : memref<16x128xf32, #tpu.memory_space<vmem>>, vector<16x32xf32>,
    %93 = vector.extract_strided_slice %89 {offsets = [2, 0, 0], sizes = [2, 8, 32], strides = [1, 1, 1]} : vector<8x8x32xf32> to vector<2x8x32xf32>
    %94 = vector.shape_cast %93 : vector<2x8x32xf32> to vector<16x32xf32>
    %c0_24 = arith.constant 0 : index
    %c32 = arith.constant 32 : index
    %95 = vector.load %arg12[%c0_24, %c32] : memref<16x128xf32, #tpu.memory_space<vmem>>, vector<16x32xf32>
    tpu.vector_store %arg12[%c0_24, %c32], %94 {strides = array<i32>} : memref<16x128xf32, #tpu.memory_space<vmem>>, vector<16x32xf32>,
    %96 = vector.extract_strided_slice %89 {offsets = [4, 0, 0], sizes = [2, 8, 32], strides = [1, 1, 1]} : vector<8x8x32xf32> to vector<2x8x32xf32>
    %97 = vector.shape_cast %96 : vector<2x8x32xf32> to vector<16x32xf32>
    %c0_25 = arith.constant 0 : index
    %c64 = arith.constant 64 : index
    %98 = vector.load %arg12[%c0_25, %c64] : memref<16x128xf32, #tpu.memory_space<vmem>>, vector<16x32xf32>
    tpu.vector_store %arg12[%c0_25, %c64], %97 {strides = array<i32>} : memref<16x128xf32, #tpu.memory_space<vmem>>, vector<16x32xf32>,
    %99 = vector.extract_strided_slice %89 {offsets = [6, 0, 0], sizes = [2, 8, 32], strides = [1, 1, 1]} : vector<8x8x32xf32> to vector<2x8x32xf32>
    %100 = vector.shape_cast %99 : vector<2x8x32xf32> to vector<16x32xf32>
    %c0_26 = arith.constant 0 : index
    %c96 = arith.constant 96 : index
    %101 = vector.load %arg12[%c0_26, %c96] : memref<16x128xf32, #tpu.memory_space<vmem>>, vector<16x32xf32>
    tpu.vector_store %arg12[%c0_26, %c96], %100 {strides = array<i32>} : memref<16x128xf32, #tpu.memory_space<vmem>>, vector<16x32xf32>,
    %c0_27 = arith.constant 0 : index
    %c0_28 = arith.constant 0 : index
    %102 = vector.load %arg12[%c0_27, %c0_28] : memref<16x128xf32, #tpu.memory_space<vmem>>, vector<16x128xf32>
    %103 = arith.truncf %102 : vector<16x128xf32> to vector<16x128xbf16>
    %c0_29 = arith.constant 0 : index
    %c0_30 = arith.constant 0 : index
    %c0_31 = arith.constant 0 : index
    %104 = vector.load %arg5[%c0_29, %c0_30, %c0_31] : memref<1x128x128xbf16, #tpu.memory_space<vmem>>, vector<1x128x128xbf16>
    %105 = vector.shape_cast %104 : vector<1x128x128xbf16> to vector<128x128xbf16>
    %cst_32 = arith.constant dense<0.000000e+00> : vector<16x128xf32>
    %106 = tpu.matmul %103, %105, %cst_32 {dimension_numbers = #tpu.dot_dimension_numbers<[1], [0], [0], [1], [0, 0, 1, 1], [], []>} : vector<16x128xbf16>, vector<128x128xbf16>, vector<16x128xf32> -> vector<16x128xf32>
    %c0_33 = arith.constant 0 : index
    %c0_34 = arith.constant 0 : index
    %c0_35 = arith.constant 0 : index
    %107 = vector.load %arg6[%c0_33, %c0_34, %c0_35] : memref<1x1x128xf32, #tpu.memory_space<vmem>>, vector<1x1x128xf32>
    %108 = vector.shape_cast %107 : vector<1x1x128xf32> to vector<1x128xf32>
    %109 = vector.broadcast %108 : vector<1x128xf32> to vector<16x128xf32>
    %110 = arith.addf %106, %109 : vector<16x128xf32>
    %111 = arith.addf %110, %29 : vector<16x128xf32>
    %112 = vector.extract_strided_slice %5 {offsets = [2, 0], sizes = [1, 128], strides = [1, 1]} : vector<4x128xf32> to vector<1x128xf32>
    %113 = vector.extract_strided_slice %5 {offsets = [3, 0], sizes = [1, 128], strides = [1, 1]} : vector<4x128xf32> to vector<1x128xf32>
    %cst_36 = arith.constant dense<0.000000e+00> : vector<16xf32>
    %114 = vector.multi_reduction <add>, %111, %cst_36 [1] : vector<16x128xf32> to vector<16xf32>
    %115 = vector.shape_cast %114 : vector<16xf32> to vector<16x1xf32>
    %cst_37 = arith.constant 1.280000e+02 : f32
    %116 = vector.broadcast %cst_37 : f32 to vector<16x1xf32>
    %117 = arith.divf %115, %116 : vector<16x1xf32>
    %118 = vector.broadcast %117 : vector<16x1xf32> to vector<16x128xf32>
    %119 = arith.subf %111, %118 : vector<16x128xf32>
    %120 = arith.mulf %119, %119 : vector<16x128xf32>
    %cst_38 = arith.constant dense<0.000000e+00> : vector<16xf32>
    %121 = vector.multi_reduction <add>, %120, %cst_38 [1] : vector<16x128xf32> to vector<16xf32>
    %122 = vector.shape_cast %121 : vector<16xf32> to vector<16x1xf32>
    %cst_39 = arith.constant 1.280000e+02 : f32
    %123 = vector.broadcast %cst_39 : f32 to vector<16x1xf32>
    %124 = arith.divf %122, %123 : vector<16x1xf32>
    %125 = vector.broadcast %117 : vector<16x1xf32> to vector<16x128xf32>
    %126 = arith.subf %111, %125 : vector<16x128xf32>
    %cst_40 = arith.constant 9.99999996E-13 : f32
    %127 = vector.broadcast %cst_40 : f32 to vector<16x1xf32>
    %128 = arith.addf %124, %127 : vector<16x1xf32>
    %129 = math.rsqrt %128 : vector<16x1xf32>
    %130 = vector.broadcast %129 : vector<16x1xf32> to vector<16x128xf32>
    %131 = arith.mulf %126, %130 : vector<16x128xf32>
    %132 = vector.broadcast %112 : vector<1x128xf32> to vector<16x128xf32>
    %133 = arith.mulf %131, %132 : vector<16x128xf32>
    %134 = vector.broadcast %113 : vector<1x128xf32> to vector<16x128xf32>
    %135 = arith.addf %133, %134 : vector<16x128xf32>
    %136 = arith.truncf %135 : vector<16x128xf32> to vector<16x128xbf16>
    %c0_41 = arith.constant 0 : index
    %c0_42 = arith.constant 0 : index
    %c0_43 = arith.constant 0 : index
    %137 = vector.load %arg7[%c0_41, %c0_42, %c0_43] : memref<1x128x256xbf16, #tpu.memory_space<vmem>>, vector<1x128x256xbf16>
    %138 = vector.shape_cast %137 : vector<1x128x256xbf16> to vector<128x256xbf16>
    %cst_44 = arith.constant dense<0.000000e+00> : vector<16x256xf32>
    %139 = tpu.matmul %136, %138, %cst_44 {dimension_numbers = #tpu.dot_dimension_numbers<[1], [0], [0], [1], [0, 0, 1, 1], [], []>} : vector<16x128xbf16>, vector<128x256xbf16>, vector<16x256xf32> -> vector<16x256xf32>
    %c0_45 = arith.constant 0 : index
    %c0_46 = arith.constant 0 : index
    %c0_47 = arith.constant 0 : index
    %140 = vector.load %arg8[%c0_45, %c0_46, %c0_47] : memref<1x1x256xf32, #tpu.memory_space<vmem>>, vector<1x1x256xf32>
    %141 = vector.shape_cast %140 : vector<1x1x256xf32> to vector<1x256xf32>
    %142 = vector.broadcast %141 : vector<1x256xf32> to vector<16x256xf32>
    %143 = arith.addf %139, %142 : vector<16x256xf32>
    %cst_48 = arith.constant 0.000000e+00 : f32
    %144 = vector.broadcast %cst_48 : f32 to vector<16x256xf32>
    %145 = arith.maximumf %143, %144 : vector<16x256xf32>
    %146 = arith.truncf %145 : vector<16x256xf32> to vector<16x256xbf16>
    %c0_49 = arith.constant 0 : index
    %c0_50 = arith.constant 0 : index
    %c0_51 = arith.constant 0 : index
    %147 = vector.load %arg9[%c0_49, %c0_50, %c0_51] : memref<1x256x128xbf16, #tpu.memory_space<vmem>>, vector<1x256x128xbf16>
    %148 = vector.shape_cast %147 : vector<1x256x128xbf16> to vector<256x128xbf16>
    %cst_52 = arith.constant dense<0.000000e+00> : vector<16x128xf32>
    %149 = tpu.matmul %146, %148, %cst_52 {dimension_numbers = #tpu.dot_dimension_numbers<[1], [0], [0], [1], [0, 0, 1, 1], [], []>} : vector<16x256xbf16>, vector<256x128xbf16>, vector<16x128xf32> -> vector<16x128xf32>
    %c0_53 = arith.constant 0 : index
    %c0_54 = arith.constant 0 : index
    %c0_55 = arith.constant 0 : index
    %150 = vector.load %arg10[%c0_53, %c0_54, %c0_55] : memref<1x1x128xf32, #tpu.memory_space<vmem>>, vector<1x1x128xf32>
    %151 = vector.shape_cast %150 : vector<1x1x128xf32> to vector<1x128xf32>
    %152 = vector.broadcast %151 : vector<1x128xf32> to vector<16x128xf32>
    %153 = arith.addf %149, %152 : vector<16x128xf32>
    %154 = arith.addf %153, %135 : vector<16x128xf32>
    %c0_56 = arith.constant 0 : index
    %c0_57 = arith.constant 0 : index
    %155 = vector.load %arg11[%c0_56, %c0_57] : memref<16x128xf32, #tpu.memory_space<vmem>>, vector<16x128xf32>
    tpu.vector_store %arg11[%c0_56, %c0_57], %154 {strides = array<i32>} : memref<16x128xf32, #tpu.memory_space<vmem>>, vector<16x128xf32>,
    return
  }
  func.func @transform_0(%arg0: i32) -> (i32, i32) {
    %c0_i32 = arith.constant 0 : i32
    %c0_i32_0 = arith.constant 0 : i32
    %c0_i32_1 = arith.constant 0 : i32
    return %c0_i32, %c0_i32_0 : i32, i32
  }
  func.func @transform_1(%arg0: i32) -> (i32, i32, i32) {
    %c0_i32 = arith.constant 0 : i32
    %c0_i32_0 = arith.constant 0 : i32
    %c0_i32_1 = arith.constant 0 : i32
    return %arg0, %c0_i32, %c0_i32_0 : i32, i32, i32
  }
  func.func @transform_2(%arg0: i32) -> (i32, i32, i32) {
    %c0_i32 = arith.constant 0 : i32
    %c0_i32_0 = arith.constant 0 : i32
    %c0_i32_1 = arith.constant 0 : i32
    return %arg0, %c0_i32, %c0_i32_0 : i32, i32, i32
  }
  func.func @transform_3(%arg0: i32) -> (i32, i32, i32) {
    %c0_i32 = arith.constant 0 : i32
    %c0_i32_0 = arith.constant 0 : i32
    %c0_i32_1 = arith.constant 0 : i32
    return %arg0, %c0_i32, %c0_i32_0 : i32, i32, i32
  }
  func.func @transform_4(%arg0: i32) -> (i32, i32, i32) {
    %c0_i32 = arith.constant 0 : i32
    %c0_i32_0 = arith.constant 0 : i32
    %c0_i32_1 = arith.constant 0 : i32
    return %arg0, %c0_i32, %c0_i32_0 : i32, i32, i32
  }
  func.func @transform_5(%arg0: i32) -> (i32, i32, i32) {
    %c0_i32 = arith.constant 0 : i32
    %c0_i32_0 = arith.constant 0 : i32
    %c0_i32_1 = arith.constant 0 : i32
    return %arg0, %c0_i32, %c0_i32_0 : i32, i32, i32
  }
  func.func @transform_6(%arg0: i32) -> (i32, i32, i32) {
    %c0_i32 = arith.constant 0 : i32
    %c0_i32_0 = arith.constant 0 : i32
    %c0_i32_1 = arith.constant 0 : i32
    return %arg0, %c0_i32, %c0_i32_0 : i32, i32, i32
  }
  func.func @transform_7(%arg0: i32) -> (i32, i32, i32) {
    %c0_i32 = arith.constant 0 : i32
    %c0_i32_0 = arith.constant 0 : i32
    %c0_i32_1 = arith.constant 0 : i32
    return %arg0, %c0_i32, %c0_i32_0 : i32, i32, i32
  }
  func.func @transform_8(%arg0: i32) -> (i32, i32, i32) {
    %c0_i32 = arith.constant 0 : i32
    %c0_i32_0 = arith.constant 0 : i32
    %c0_i32_1 = arith.constant 0 : i32
    return %arg0, %c0_i32, %c0_i32_0 : i32, i32, i32
  }
  func.func @transform_9(%arg0: i32) -> (i32, i32, i32) {
    %c0_i32 = arith.constant 0 : i32
    %c0_i32_0 = arith.constant 0 : i32
    %c0_i32_1 = arith.constant 0 : i32
    return %arg0, %c0_i32, %c0_i32_0 : i32, i32, i32
  }
  func.func @transform_10(%arg0: i32) -> (i32, i32) {
    %c0_i32 = arith.constant 0 : i32
    %c0_i32_0 = arith.constant 0 : i32
    %c0_i32_1 = arith.constant 0 : i32
    return %c0_i32, %c0_i32_0 : i32, i32
  }
}

</mosaic_0001>

<llo_original>
// kernel: transformer_lm_forward.3
$region0: #{transformer_lm_forward.3}
  #allocation0 [shape = 'u32[]', space=smem, size = 0x4, offset = 0x4, fixed_abs, tag = 'smem constant byte address 0x4 - core index']
  #allocation1 [shape = 'u32[72,128]{1,0:T(1,128)}', space=vmem, size = 0x9000, scoped, tag = 'internal scratch']
  %s0 = inlined_call_operand.vmem [shape: f32[16,128], index: 0, kind: input, shape index: {}]
  %s1 = inlined_call_operand.vmem [shape: bf16[128,256], index: 1, kind: input, shape index: {}]
  %s2 = inlined_call_operand.hbm [shape: f32[16,256], index: 2, kind: output, shape index: {}]
  %s3 = sld [smem:[#allocation0]]
  $region82: #{transformer_lm_forward.3} parent=0
    _
  %s5 = ssub.s32 1, %s3
  %s6 = scalar_select 0, %s5, %s3
  $region1: #{transformer_lm_forward.3} parent=0
    #allocation2 [shape = 'u8[65536]{0}', space=vmem, size = 0x10000, scoped, tag = 'input window, operand 1']
    #allocation3 [shape = 'u8[16384]{0}', space=vmem, size = 0x4000, scoped, tag = 'output window, operand 0']
    #allocation4 [shape = 's32[2]{0}', space=sflag, size = 0x8, scoped, tag = 'scoped memory for transformer_lm_forward.3']
    %7 = vsyncpa [#allocation4], 0
    %s8 = scalar_lea.sflag [#allocation4], 1
    %9 = vsyncpa %s8, 0
    loop: start=0, step=1, limit=4
    $region2: #{transformer_lm_forward.3} parent=1 // loop_pre_header
      _
    $region3: #{transformer_lm_forward.3} parent=1 // loop_header
      %s11 = sphi 0, %s15
      %p12 = scmp.ge.s32.totalorder %s11, 4
      %s19 = sphi 0, %s19
      %s21 = sphi 0, %s19
      %s22 = sphi 0, %s21
      %s36 = sphi 0, %s22
      %s42 = sphi 0, %s44
      %s45 = sphi 0, %s42
      %s46 = sphi 0, %s45
      %s62 = sphi 0, %s46
      %s68 = sphi 0, %s70
      %s71 = sphi 0, %s68
      %s72 = sphi 0, %s71
      %s88 = sphi 0, %s72
    $region4: #{transformer_lm_forward.3} parent=1 // loop_header_branch
      %14 = sbr.rel (%p12) target = $region8
    $region5: #{transformer_lm_forward.3} parent=1 // loop_body
      %s16 = ssub.s32 %s11, 1
      %s17 = ssub.s32 %s11, 2
      %s18 = sadd.s32 %s11, 1
      %s20 = sadd.s32 %s19, 1
      %p23 = scmp.eq.s32.totalorder %s11, 1
      %p24 = scmp.ne.s32.totalorder %s19, %s21
      %p25 = scmp.eq.s32.totalorder %s11, 0
      %p26 = por %p24, %p25
      %p27 = scmp.ne.s32.totalorder %s19, %s21
      %p28 = scmp.eq.s32.totalorder %s16, 1
      %p29 = por %p27, %p28
      %p30 = scmp.ne.s32.totalorder %s21, %s22
      %p31 = scmp.eq.s32.totalorder %s16, 0
      %p32 = por %p30, %p31
      %p33 = scmp.ne.s32.totalorder %s21, %s22
      %p34 = scmp.eq.s32.totalorder %s17, 1
      %p35 = por %p33, %p34
      %p37 = scmp.ne.s32.totalorder %s22, %s36
      %p38 = scmp.eq.s32.totalorder %s17, 0
      %p39 = por %p37, %p38
      %s40 = ssub.s32 %s11, %s18
      %p41 = scmp.eq.s32.totalorder %s40, 0
      %s43 = sadd.s32 %s42, 1
      %s44 = scalar_select %p41, %s42, %s43
      %p47 = pneg %p41
      %p48 = scmp.eq.s32.totalorder %s11, 1
      %p49 = por %p47, %p48
      %p50 = scmp.ne.s32.totalorder %s42, %s45
      %p51 = scmp.eq.s32.totalorder %s11, 0
      %p52 = por %p50, %p51
      %p53 = scmp.ne.s32.totalorder %s42, %s45
      %p54 = scmp.eq.s32.totalorder %s16, 1
      %p55 = por %p53, %p54
      %p56 = scmp.ne.s32.totalorder %s45, %s46
      %p57 = scmp.eq.s32.totalorder %s16, 0
      %p58 = por %p56, %p57
      %p59 = scmp.ne.s32.totalorder %s45, %s46
      %p60 = scmp.eq.s32.totalorder %s17, 1
      %p61 = por %p59, %p60
      %p63 = scmp.ne.s32.totalorder %s46, %s62
      %p64 = scmp.eq.s32.totalorder %s17, 0
      %p65 = por %p63, %p64
      %s66 = ssub.s32 %s11, %s18
      %p67 = scmp.eq.s32.totalorder %s66, 0
      %s69 = sadd.s32 %s68, 1
      %s70 = scalar_select %p67, %s68, %s69
      %p73 = pneg %p67
      %p74 = scmp.eq.s32.totalorder %s11, 1
      %p75 = por %p73, %p74
      %p76 = scmp.ne.s32.totalorder %s68, %s71
      %p77 = scmp.eq.s32.totalorder %s11, 0
      %p78 = por %p76, %p77
      %p79 = scmp.ne.s32.totalorder %s68, %s71
      %p80 = scmp.eq.s32.totalorder %s16, 1
      %p81 = por %p79, %p80
      %p82 = scmp.ne.s32.totalorder %s71, %s72
      %p83 = scmp.eq.s32.totalorder %s16, 0
      %p84 = por %p82, %p83
      %p85 = scmp.ne.s32.totalorder %s71, %s72
      %p86 = scmp.eq.s32.totalorder %s17, 1
      %p87 = por %p85, %p86
      %p89 = scmp.ne.s32.totalorder %s72, %s88
      %p90 = scmp.eq.s32.totalorder %s17, 0
      %p91 = por %p89, %p90
      %p92 = scmp.le.s32.totalorder 1, %s11
      %p93 = scmp.lt.s32.totalorder %s11, 3
      %p94 = pnand %p92, %p93
      %p95 = pneg %p94
      // Predicated region
      $region9: #{transformer_lm_forward.3} parent=5 // pred_check
        _
      $region10: #{transformer_lm_forward.3} parent=5 // pred_check_branch
        %97 = sbr.rel (%p94) target = $region12
      $region11: #{transformer_lm_forward.3} parent=5 // pred_region
        %s98 = ssub.s32 %s11, 1
        // Predicated region
        $region13: #{transformer_lm_forward.3} parent=11 // pred_check
          %p99 = pneg %p32
        $region14: #{transformer_lm_forward.3} parent=11 // pred_check_branch
          %101 = sbr.rel (%p99) target = $region16
        $region15: #{transformer_lm_forward.3} parent=11 // pred_region
          _
        $region16: #{transformer_lm_forward.3} parent=11 // pred_fallthru
          _
      $region12: #{transformer_lm_forward.3} parent=5 // pred_fallthru
        _
      %p102 = scmp.lt.s32.totalorder %s11, 2
      // Predicated region
      $region17: #{transformer_lm_forward.3} parent=5 // pred_check
        %p103 = pneg %p102
      $region18: #{transformer_lm_forward.3} parent=5 // pred_check_branch
        %105 = sbr.rel (%p103) target = $region20
      $region19: #{transformer_lm_forward.3} parent=5 // pred_region
        // Predicated region
        $region21: #{transformer_lm_forward.3} parent=19 // pred_check
          %p106 = pneg %p52
        $region22: #{transformer_lm_forward.3} parent=19 // pred_check_branch
          %108 = sbr.rel (%p106) target = $region24
        $region23: #{transformer_lm_forward.3} parent=19 // pred_region
          %s109 = sand.u32 %s42, 1
          %s110 = sand.u32 %s42, 1
          %s111 = smul.addr %s110, 64
          %s112 = scalar_lea.vmem [#allocation2], %s111
          %s113 = smul.addr %s11, 4
          %s114 = scalar_lea.vmem %s1, %s113
          // Predicated region
          $region25: #{transformer_lm_forward.3} parent=23 // pred_check
            _
          $region26: #{transformer_lm_forward.3} parent=23 // pred_check_branch
            %116 = sbr.rel (0) target = $region28
          $region27: #{transformer_lm_forward.3} parent=23 // pred_region
            // Predicated region
            $region29: #{transformer_lm_forward.3} parent=27 // pred_check
              _
            $region30: #{transformer_lm_forward.3} parent=27 // pred_check_branch
              %118 = sbr.rel target = $region32
            $region31: #{transformer_lm_forward.3} parent=27 // pred_region
              // Predicated region
              $region44: #{transformer_lm_forward.3} parent=31 // pred_check
                _
              $region45: #{transformer_lm_forward.3} parent=31 // pred_check_branch
                %164 = sbr.rel (0) target = $region47
              $region46: #{transformer_lm_forward.3} parent=31 // pred_region
                loop: start=0, step=1, limit=1
                $region48: #{transformer_lm_forward.3} parent=46 // loop_pre_header
                  _
                $region49: #{transformer_lm_forward.3} parent=46 // loop_header
                  %s166 = sphi 0, %s170
                  %p167 = scmp.ge.s32.totalorder %s166, 1
                  %s171 = sphi %s114, %s114
                  %s172 = sphi %s112, %s112
                $region50: #{transformer_lm_forward.3} parent=46 // loop_header_branch
                  %169 = sbr.rel (%p167) target = $region54
                $region51: #{transformer_lm_forward.3} parent=46 // loop_body
                  _
                $region52: #{transformer_lm_forward.3} parent=46 // loop_footer
                  %s170 = sadd.s32 1, %s166
                $region53: #{transformer_lm_forward.3} parent=46 // loop_footer_branch
                  %165 = sbr.rel target = $region49
                $region54: #{transformer_lm_forward.3} parent=46 // loop_exit
                  _
                %s174 = ssub.s32 16, 1
                loop: start=0, step=1, limit=1
                $region55: #{transformer_lm_forward.3} parent=46 // loop_pre_header
                  _
                $region56: #{transformer_lm_forward.3} parent=46 // loop_header
                  %s176 = sphi 0, %s180
                  %p177 = scmp.ge.s32.totalorder %s176, 1
                  %s181 = sphi %s114, %s114
                  %s182 = sphi %s112, %s112
                $region57: #{transformer_lm_forward.3} parent=46 // loop_header_branch
                  %179 = sbr.rel (%p177) target = $region61
                $region58: #{transformer_lm_forward.3} parent=46 // loop_body
                  %v183 = vld [vmem:[%s181] sm:%s174]
                  %184 = vst [vmem:[%s182] sm:%s174] %v183
                  %v185 = vld [vmem:[%s181 + $0x8] sm:%s174]
                  %186 = vst [vmem:[%s182 + $0x4] sm:%s174] %v185
                  %v187 = vld [vmem:[%s181 + $0x10] sm:%s174]
                  %188 = vst [vmem:[%s182 + $0x8] sm:%s174] %v187
                  %v189 = vld [vmem:[%s181 + $0x18] sm:%s174]
                  %190 = vst [vmem:[%s182 + $0xc] sm:%s174] %v189
                  %v191 = vld [vmem:[%s181 + $0x20] sm:%s174]
                  %192 = vst [vmem:[%s182 + $0x10] sm:%s174] %v191
                  %v193 = vld [vmem:[%s181 + $0x28] sm:%s174]
                  %194 = vst [vmem:[%s182 + $0x14] sm:%s174] %v193
                  %v195 = vld [vmem:[%s181 + $0x30] sm:%s174]
                  %196 = vst [vmem:[%s182 + $0x18] sm:%s174] %v195
                  %v197 = vld [vmem:[%s181 + $0x38] sm:%s174]
                  %198 = vst [vmem:[%s182 + $0x1c] sm:%s174] %v197
                  %v199 = vld [vmem:[%s181 + $0x40] sm:%s174]
                  %200 = vst [vmem:[%s182 + $0x20] sm:%s174] %v199
                  %v201 = vld [vmem:[%s181 + $0x48] sm:%s174]
                  %202 = vst [vmem:[%s182 + $0x24] sm:%s174] %v201
                  %v203 = vld [vmem:[%s181 + $0x50] sm:%s174]
                  %204 = vst [vmem:[%s182 + $0x28] sm:%s174] %v203
                  %v205 = vld [vmem:[%s181 + $0x58] sm:%s174]
                  %206 = vst [vmem:[%s182 + $0x2c] sm:%s174] %v205
                  %v207 = vld [vmem:[%s181 + $0x60] sm:%s174]
                  %208 = vst [vmem:[%s182 + $0x30] sm:%s174] %v207
                  %v209 = vld [vmem:[%s181 + $0x68] sm:%s174]
                  %210 = vst [vmem:[%s182 + $0x34] sm:%s174] %v209
                  %v211 = vld [vmem:[%s181 + $0x70] sm:%s174]
                  %212 = vst [vmem:[%s182 + $0x38] sm:%s174] %v211
                  %v213 = vld [vmem:[%s181 + $0x78] sm:%s174]
                  %214 = vst [vmem:[%s182 + $0x3c] sm:%s174] %v213
                $region59: #{transformer_lm_forward.3} parent=46 // loop_footer
                  %s180 = sadd.s32 1, %s176
                $region60: #{transformer_lm_forward.3} parent=46 // loop_footer_branch
                  %175 = sbr.rel target = $region56
                $region61: #{transformer_lm_forward.3} parent=46 // loop_exit
                  _
              $region47: #{transformer_lm_forward.3} parent=31 // pred_fallthru
                _
            $region32: #{transformer_lm_forward.3} parent=27 // pred_fallthru
              _
            // Predicated region
            $region33: #{transformer_lm_forward.3} parent=27 // pred_check
              _
            $region34: #{transformer_lm_forward.3} parent=27 // pred_check_branch
              %120 = sbr.rel (0) target = $region36
            $region35: #{transformer_lm_forward.3} parent=27 // pred_region
              %s122 = ssub.s32 16, 1
              loop: start=0, step=1, limit=1
              $region37: #{transformer_lm_forward.3} parent=35 // loop_pre_header
                _
              $region38: #{transformer_lm_forward.3} parent=35 // loop_header
                %s124 = sphi 0, %s128
                %p125 = scmp.ge.s32.totalorder %s124, 1
                %s129 = sphi %s114, %s114
                %s130 = sphi %s112, %s112
              $region39: #{transformer_lm_forward.3} parent=35 // loop_header_branch
                %127 = sbr.rel (%p125) target = $region43
              $region40: #{transformer_lm_forward.3} parent=35 // loop_body
                %v131 = vld [vmem:[%s129] sm:%s122]
                %132 = vst [vmem:[%s130] sm:%s122] %v131
                %v133 = vld [vmem:[%s129 + $0x8] sm:%s122]
                %134 = vst [vmem:[%s130 + $0x4] sm:%s122] %v133
                %v135 = vld [vmem:[%s129 + $0x10] sm:%s122]
                %136 = vst [vmem:[%s130 + $0x8] sm:%s122] %v135
                %v137 = vld [vmem:[%s129 + $0x18] sm:%s122]
                %138 = vst [vmem:[%s130 + $0xc] sm:%s122] %v137
                %v139 = vld [vmem:[%s129 + $0x20] sm:%s122]
                %140 = vst [vmem:[%s130 + $0x10] sm:%s122] %v139
                %v141 = vld [vmem:[%s129 + $0x28] sm:%s122]
                %142 = vst [vmem:[%s130 + $0x14] sm:%s122] %v141
                %v143 = vld [vmem:[%s129 + $0x30] sm:%s122]
                %144 = vst [vmem:[%s130 + $0x18] sm:%s122] %v143
                %v145 = vld [vmem:[%s129 + $0x38] sm:%s122]
                %146 = vst [vmem:[%s130 + $0x1c] sm:%s122] %v145
                %v147 = vld [vmem:[%s129 + $0x40] sm:%s122]
                %148 = vst [vmem:[%s130 + $0x20] sm:%s122] %v147
                %v149 = vld [vmem:[%s129 + $0x48] sm:%s122]
                %150 = vst [vmem:[%s130 + $0x24] sm:%s122] %v149
                %v151 = vld [vmem:[%s129 + $0x50] sm:%s122]
                %152 = vst [vmem:[%s130 + $0x28] sm:%s122] %v151
                %v153 = vld [vmem:[%s129 + $0x58] sm:%s122]
                %154 = vst [vmem:[%s130 + $0x2c] sm:%s122] %v153
                %v155 = vld [vmem:[%s129 + $0x60] sm:%s122]
                %156 = vst [vmem:[%s130 + $0x30] sm:%s122] %v155
                %v157 = vld [vmem:[%s129 + $0x68] sm:%s122]
                %158 = vst [vmem:[%s130 + $0x34] sm:%s122] %v157
                %v159 = vld [vmem:[%s129 + $0x70] sm:%s122]
                %160 = vst [vmem:[%s130 + $0x38] sm:%s122] %v159
                %v161 = vld [vmem:[%s129 + $0x78] sm:%s122]
                %162 = vst [vmem:[%s130 + $0x3c] sm:%s122] %v161
              $region41: #{transformer_lm_forward.3} parent=35 // loop_footer
                %s128 = sadd.s32 1, %s124
              $region42: #{transformer_lm_forward.3} parent=35 // loop_footer_branch
                %123 = sbr.rel target = $region38
              $region43: #{transformer_lm_forward.3} parent=35 // loop_exit
                _
            $region36: #{transformer_lm_forward.3} parent=27 // pred_fallthru
              _
          $region28: #{transformer_lm_forward.3} parent=23 // pred_fallthru
            _
          %215 = vnop
        $region24: #{transformer_lm_forward.3} parent=19 // pred_fallthru
          _
      $region20: #{transformer_lm_forward.3} parent=5 // pred_fallthru
        _
      %p216 = scmp.le.s32.totalorder 1, %s11
      %p217 = scmp.lt.s32.totalorder %s11, 3
      %p218 = pnand %p216, %p217
      %p219 = pneg %p218
      // Predicated region
      $region62: #{transformer_lm_forward.3} parent=5 // pred_check
        _
      $region63: #{transformer_lm_forward.3} parent=5 // pred_check_branch
        %221 = sbr.rel (%p218) target = $region65
      $region64: #{transformer_lm_forward.3} parent=5 // pred_region
        %s222 = ssub.s32 %s11, 1
        %s223 = sand.u32 %s45, 1
        %s224 = sand.u32 %s45, 1
        %s225 = smul.addr %s224, 64
        %s226 = scalar_lea.vmem [#allocation2], %s225
        // Predicated region
        $region66: #{transformer_lm_forward.3} parent=64 // pred_check
          %p227 = pneg %p58
        $region67: #{transformer_lm_forward.3} parent=64 // pred_check_branch
          %229 = sbr.rel (%p227) target = $region69
        $region68: #{transformer_lm_forward.3} parent=64 // pred_region
          _
        $region69: #{transformer_lm_forward.3} parent=64 // pred_fallthru
          _
        %p230 = pneg %p32
        %p231 = pneg %p29
        %s232 = sand.u32 %s45, 1
        %s233 = sand.u32 %s45, 1
        %s234 = smul.addr %s233, 64
        %s235 = scalar_lea.vmem [#allocation2], %s234
        %p236 = pneg %p58
        %p237 = pneg %p55
        %p238 = pneg %p84
        %p239 = pneg %p81
        %s240 = sand.u32 %s71, 1
        %s241 = scalar_lea.sflag [#allocation4], %s240
        %s242 = sand.u32 %s71, 1
        %s243 = smul.addr %s242, 16
        %s244 = scalar_lea.vmem [#allocation3], %s243
        %v245 = vld [vmem:[%s0] sm:$0xff]
        %v246 = vld [vmem:[%s0 + $0x8] sm:$0xff]
        %v247 = vpack.c.bf16 %v246, %v245
        %v248 = vld [vmem:[%s226] sm:$0xf]
        %v249 = vld [vmem:[%s226 + $0x4] sm:$0xf]
        %v250 = vld [vmem:[%s226 + $0x8] sm:$0xf]
        %v251 = vld [vmem:[%s226 + $0xc] sm:$0xf]
        %v252 = vld [vmem:[%s226 + $0x10] sm:$0xf]
        %v253 = vld [vmem:[%s226 + $0x14] sm:$0xf]
        %v254 = vld [vmem:[%s226 + $0x18] sm:$0xf]
        %v255 = vld [vmem:[%s226 + $0x1c] sm:$0xf]
        %v256 = vld [vmem:[%s226 + $0x20] sm:$0xf]
        %v257 = vld [vmem:[%s226 + $0x24] sm:$0xf]
        %v258 = vld [vmem:[%s226 + $0x28] sm:$0xf]
        %v259 = vld [vmem:[%s226 + $0x2c] sm:$0xf]
        %v260 = vld [vmem:[%s226 + $0x30] sm:$0xf]
        %v261 = vld [vmem:[%s226 + $0x34] sm:$0xf]
        %v262 = vld [vmem:[%s226 + $0x38] sm:$0xf]
        %v263 = vld [vmem:[%s226 + $0x3c] sm:$0xf]
        %v280 = vunpack.c.l.b16 %v248
        %v281 = vunpack.c.l.b16 %v249
        %v282 = vunpack.c.l.b16 %v250
        %v283 = vunpack.c.l.b16 %v251
        %v284 = vunpack.c.l.b16 %v252
        %v285 = vunpack.c.l.b16 %v253
        %v286 = vunpack.c.l.b16 %v254
        %v287 = vunpack.c.l.b16 %v255
        %v288 = vunpack.c.l.b16 %v256
        %v289 = vunpack.c.l.b16 %v257
        %v290 = vunpack.c.l.b16 %v258
        %v291 = vunpack.c.l.b16 %v259
        %v292 = vunpack.c.l.b16 %v260
        %v293 = vunpack.c.l.b16 %v261
        %v294 = vunpack.c.l.b16 %v262
        %v295 = vunpack.c.l.b16 %v263
        %v296 = vpack.c.b16 %v281, %v280
        %v297 = vpack.c.b16 %v283, %v282
        %v298 = vpack.c.b16 %v285, %v284
        %v299 = vpack.c.b16 %v287, %v286
        %v300 = vpack.c.b16 %v289, %v288
        %v301 = vpack.c.b16 %v291, %v290
        %v302 = vpack.c.b16 %v293, %v292
        %v303 = vpack.c.b16 %v295, %v294
        %312 = vmatpush.bf16.msra.mxu0 %v303
        %313 = vmatpush.bf16.msra.mxu0 %v302
        %314 = vmatpush.bf16.msra.mxu0 %v301
        %315 = vmatpush.bf16.msra.mxu0 %v300
        %316 = vmatpush.bf16.msra.mxu0 %v299
        %317 = vmatpush.bf16.msra.mxu0 %v298
        %318 = vmatpush.bf16.msra.mxu0 %v297
        %319 = vmatpush.bf16.msra.mxu0 %v296
        %320 = vmatmul.bf16.gmra.mxu0 %v247
        %v321 = vpop.f32.mrf.mxu0
        %v322 = vadd.f32 0.0, %v321
        %v323 = vpop.f32.mrf.mxu0
        %v324 = vadd.f32 0.0, %v323
        %325 = vdwg.mxu0
        %326 = vst [vmem:[%s244] sm:$0xff] %v322
        %327 = vst [vmem:[%s244 + $0x8] sm:$0xff] %v324
        %s328 = sand.u32 %s71, 1
        %s329 = scalar_lea.sflag [#allocation4], %s328
        %s330 = sand.u32 %s71, 1
        %s331 = smul.addr %s330, 16
        %s332 = scalar_lea.vmem [#allocation3], %s331
        // Predicated region
        $region70: #{transformer_lm_forward.3} parent=64 // pred_check
          %p333 = pneg %p81
        $region71: #{transformer_lm_forward.3} parent=64 // pred_check_branch
          %335 = sbr.rel (%p333) target = $region73
        $region72: #{transformer_lm_forward.3} parent=64 // pred_region
          %337 = vsyncadd %s329, 0
          %s338 = smul.addr %s16, 8
          %s339 = scalar_lea.hbm %s2, %s338
          %s340 = sshll.u32 %s332, 4
          %s341 = int_to_ptr.vmem [resolvable:$true] %s340
          %s342 = sshll.u32 %s339, 4
          %s343 = int_to_ptr.hbm [resolvable:$true] %s342
          %348 = dma.vmem_to_hbm [thread:$0]  %s341, 256, %s343, %s329, 128, 256, 8
        $region73: #{transformer_lm_forward.3} parent=64 // pred_fallthru
          _
      $region65: #{transformer_lm_forward.3} parent=5 // pred_fallthru
        _
      %p349 = scmp.le.s32.totalorder 2, %s11
      // Predicated region
      $region74: #{transformer_lm_forward.3} parent=5 // pred_check
        %p350 = pneg %p349
      $region75: #{transformer_lm_forward.3} parent=5 // pred_check_branch
        %352 = sbr.rel (%p350) target = $region77
      $region76: #{transformer_lm_forward.3} parent=5 // pred_region
        %s353 = ssub.s32 %s11, 2
        // Predicated region
        $region78: #{transformer_lm_forward.3} parent=76 // pred_check
          %p354 = pneg %p87
        $region79: #{transformer_lm_forward.3} parent=76 // pred_check_branch
          %356 = sbr.rel (%p354) target = $region81
        $region80: #{transformer_lm_forward.3} parent=76 // pred_region
          %s357 = sand.u32 %s72, 1
          %s358 = scalar_lea.sflag [#allocation4], %s357
          %s359 = sand.u32 %s72, 1
          %s360 = smul.addr %s359, 16
          %s361 = scalar_lea.vmem [#allocation3], %s360
          %363 = dma.done %s358, 256
        $region81: #{transformer_lm_forward.3} parent=76 // pred_fallthru
          _
      $region77: #{transformer_lm_forward.3} parent=5 // pred_fallthru
        _
    $region6: #{transformer_lm_forward.3} parent=1 // loop_footer
      %s15 = sadd.s32 1, %s11
    $region7: #{transformer_lm_forward.3} parent=1 // loop_footer_branch
      %10 = sbr.rel target = $region3
    $region8: #{transformer_lm_forward.3} parent=1 // loop_exit
      _
    %364 = vsyncpa [#allocation4], 1
    %s365 = scalar_lea.sflag [#allocation4], 1
    %366 = vsyncpa %s365, 1

// kernel: transformer_lm_forward.2
$region0: #{transformer_lm_forward.2}
  #allocation0 [shape = 'u32[]', space=smem, size = 0x4, offset = 0x4, fixed_abs, tag = 'smem constant byte address 0x4 - core index']
  #allocation1 [shape = 'u32[72,128]{1,0:T(1,128)}', space=vmem, size = 0x9000, scoped, tag = 'internal scratch']
  #allocation2 [shape = 'f32[16,128]{1,0:T(8,128)}', space=vmem, size = 0x2000, scoped, tag = 'scratch operand']
  %s0 = inlined_call_operand.vmem [shape: f32[16,128], index: 0, kind: input, shape index: {}]
  %s1 = inlined_call_operand.vmem [shape: f32[2,4,128], index: 1, kind: input, shape index: {}]
  %s2 = inlined_call_operand.vmem [shape: bf16[2,128,384], index: 2, kind: input, shape index: {}]
  %s3 = inlined_call_operand.vmem [shape: f32[2,1,384], index: 3, kind: input, shape index: {}]
  %s4 = inlined_call_operand.vmem [shape: bf16[2,128,128], index: 4, kind: input, shape index: {}]
  %s5 = inlined_call_operand.vmem [shape: f32[2,1,128], index: 5, kind: input, shape index: {}]
  %s6 = inlined_call_operand.vmem [shape: bf16[2,128,256], index: 6, kind: input, shape index: {}]
  %s7 = inlined_call_operand.vmem [shape: f32[2,1,256], index: 7, kind: input, shape index: {}]
  %s8 = inlined_call_operand.vmem [shape: bf16[2,256,128], index: 8, kind: input, shape index: {}]
  %s9 = inlined_call_operand.vmem [shape: f32[2,1,128], index: 9, kind: input, shape index: {}]
  %s10 = inlined_call_operand.vmem [shape: f32[16,128], index: 10, kind: output, shape index: {}]
  %s11 = sld [smem:[#allocation0]]
  $region77: #{transformer_lm_forward.2} parent=0
    _
  %s13 = ssub.s32 1, %s11
  %s14 = scalar_select 0, %s13, %s11
  loop: start=0, step=1, limit=4
  $region2: #{transformer_lm_forward.2} parent=0 // loop_pre_header
    _
  $region3: #{transformer_lm_forward.2} parent=0 // loop_header
    %s16 = sphi 0, %s20
    %p17 = scmp.ge.s32.totalorder %s16, 4
    %s24 = sphi 0, %s24
    %s26 = sphi 0, %s24
    %s27 = sphi 0, %s26
    %s41 = sphi 0, %s27
    %s47 = sphi 0, %s49
    %s50 = sphi 0, %s47
    %s51 = sphi 0, %s50
    %s67 = sphi 0, %s51
    %s73 = sphi 0, %s75
    %s76 = sphi 0, %s73
    %s77 = sphi 0, %s76
    %s93 = sphi 0, %s77
    %s99 = sphi 0, %s101
    %s102 = sphi 0, %s99
    %s103 = sphi 0, %s102
    %s119 = sphi 0, %s103
    %s125 = sphi 0, %s127
    %s128 = sphi 0, %s125
    %s129 = sphi 0, %s128
    %s145 = sphi 0, %s129
    %s151 = sphi 0, %s153
    %s154 = sphi 0, %s151
    %s155 = sphi 0, %s154
    %s171 = sphi 0, %s155
    %s177 = sphi 0, %s179
    %s180 = sphi 0, %s177
    %s181 = sphi 0, %s180
    %s197 = sphi 0, %s181
    %s203 = sphi 0, %s205
    %s206 = sphi 0, %s203
    %s207 = sphi 0, %s206
    %s223 = sphi 0, %s207
    %s229 = sphi 0, %s231
    %s232 = sphi 0, %s229
    %s233 = sphi 0, %s232
    %s249 = sphi 0, %s233
    %s255 = sphi 0, %s257
    %s258 = sphi 0, %s255
    %s259 = sphi 0, %s258
    %s275 = sphi 0, %s259
    %s279 = sphi 0, %s279
    %s281 = sphi 0, %s279
    %s282 = sphi 0, %s281
    %s296 = sphi 0, %s282
  $region4: #{transformer_lm_forward.2} parent=0 // loop_header_branch
    %19 = sbr.rel (%p17) target = $region8
  $region5: #{transformer_lm_forward.2} parent=0 // loop_body
    %s21 = ssub.s32 %s16, 1
    %s22 = ssub.s32 %s16, 2
    %s23 = sadd.s32 %s16, 1
    %s25 = sadd.s32 %s24, 1
    %p28 = scmp.eq.s32.totalorder %s16, 1
    %p29 = scmp.ne.s32.totalorder %s24, %s26
    %p30 = scmp.eq.s32.totalorder %s16, 0
    %p31 = por %p29, %p30
    %p32 = scmp.ne.s32.totalorder %s24, %s26
    %p33 = scmp.eq.s32.totalorder %s21, 1
    %p34 = por %p32, %p33
    %p35 = scmp.ne.s32.totalorder %s26, %s27
    %p36 = scmp.eq.s32.totalorder %s21, 0
    %p37 = por %p35, %p36
    %p38 = scmp.ne.s32.totalorder %s26, %s27
    %p39 = scmp.eq.s32.totalorder %s22, 1
    %p40 = por %p38, %p39
    %p42 = scmp.ne.s32.totalorder %s27, %s41
    %p43 = scmp.eq.s32.totalorder %s22, 0
    %p44 = por %p42, %p43
    %s45 = ssub.s32 %s16, %s23
    %p46 = scmp.eq.s32.totalorder %s45, 0
    %s48 = sadd.s32 %s47, 1
    %s49 = scalar_select %p46, %s47, %s48
    %p52 = pneg %p46
    %p53 = scmp.eq.s32.totalorder %s16, 1
    %p54 = por %p52, %p53
    %p55 = scmp.ne.s32.totalorder %s47, %s50
    %p56 = scmp.eq.s32.totalorder %s16, 0
    %p57 = por %p55, %p56
    %p58 = scmp.ne.s32.totalorder %s47, %s50
    %p59 = scmp.eq.s32.totalorder %s21, 1
    %p60 = por %p58, %p59
    %p61 = scmp.ne.s32.totalorder %s50, %s51
    %p62 = scmp.eq.s32.totalorder %s21, 0
    %p63 = por %p61, %p62
    %p64 = scmp.ne.s32.totalorder %s50, %s51
    %p65 = scmp.eq.s32.totalorder %s22, 1
    %p66 = por %p64, %p65
    %p68 = scmp.ne.s32.totalorder %s51, %s67
    %p69 = scmp.eq.s32.totalorder %s22, 0
    %p70 = por %p68, %p69
    %s71 = ssub.s32 %s16, %s23
    %p72 = scmp.eq.s32.totalorder %s71, 0
    %s74 = sadd.s32 %s73, 1
    %s75 = scalar_select %p72, %s73, %s74
    %p78 = pneg %p72
    %p79 = scmp.eq.s32.totalorder %s16, 1
    %p80 = por %p78, %p79
    %p81 = scmp.ne.s32.totalorder %s73, %s76
    %p82 = scmp.eq.s32.totalorder %s16, 0
    %p83 = por %p81, %p82
    %p84 = scmp.ne.s32.totalorder %s73, %s76
    %p85 = scmp.eq.s32.totalorder %s21, 1
    %p86 = por %p84, %p85
    %p87 = scmp.ne.s32.totalorder %s76, %s77
    %p88 = scmp.eq.s32.totalorder %s21, 0
    %p89 = por %p87, %p88
    %p90 = scmp.ne.s32.totalorder %s76, %s77
    %p91 = scmp.eq.s32.totalorder %s22, 1
    %p92 = por %p90, %p91
    %p94 = scmp.ne.s32.totalorder %s77, %s93
    %p95 = scmp.eq.s32.totalorder %s22, 0
    %p96 = por %p94, %p95
    %s97 = ssub.s32 %s16, %s23
    %p98 = scmp.eq.s32.totalorder %s97, 0
    %s100 = sadd.s32 %s99, 1
    %s101 = scalar_select %p98, %s99, %s100
    %p104 = pneg %p98
    %p105 = scmp.eq.s32.totalorder %s16, 1
    %p106 = por %p104, %p105
    %p107 = scmp.ne.s32.totalorder %s99, %s102
    %p108 = scmp.eq.s32.totalorder %s16, 0
    %p109 = por %p107, %p108
    %p110 = scmp.ne.s32.totalorder %s99, %s102
    %p111 = scmp.eq.s32.totalorder %s21, 1
    %p112 = por %p110, %p111
    %p113 = scmp.ne.s32.totalorder %s102, %s103
    %p114 = scmp.eq.s32.totalorder %s21, 0
    %p115 = por %p113, %p114
    %p116 = scmp.ne.s32.totalorder %s102, %s103
    %p117 = scmp.eq.s32.totalorder %s22, 1
    %p118 = por %p116, %p117
    %p120 = scmp.ne.s32.totalorder %s103, %s119
    %p121 = scmp.eq.s32.totalorder %s22, 0
    %p122 = por %p120, %p121
    %s123 = ssub.s32 %s16, %s23
    %p124 = scmp.eq.s32.totalorder %s123, 0
    %s126 = sadd.s32 %s125, 1
    %s127 = scalar_select %p124, %s125, %s126
    %p130 = pneg %p124
    %p131 = scmp.eq.s32.totalorder %s16, 1
    %p132 = por %p130, %p131
    %p133 = scmp.ne.s32.totalorder %s125, %s128
    %p134 = scmp.eq.s32.totalorder %s16, 0
    %p135 = por %p133, %p134
    %p136 = scmp.ne.s32.totalorder %s125, %s128
    %p137 = scmp.eq.s32.totalorder %s21, 1
    %p138 = por %p136, %p137
    %p139 = scmp.ne.s32.totalorder %s128, %s129
    %p140 = scmp.eq.s32.totalorder %s21, 0
    %p141 = por %p139, %p140
    %p142 = scmp.ne.s32.totalorder %s128, %s129
    %p143 = scmp.eq.s32.totalorder %s22, 1
    %p144 = por %p142, %p143
    %p146 = scmp.ne.s32.totalorder %s129, %s145
    %p147 = scmp.eq.s32.totalorder %s22, 0
    %p148 = por %p146, %p147
    %s149 = ssub.s32 %s16, %s23
    %p150 = scmp.eq.s32.totalorder %s149, 0
    %s152 = sadd.s32 %s151, 1
    %s153 = scalar_select %p150, %s151, %s152
    %p156 = pneg %p150
    %p157 = scmp.eq.s32.totalorder %s16, 1
    %p158 = por %p156, %p157
    %p159 = scmp.ne.s32.totalorder %s151, %s154
    %p160 = scmp.eq.s32.totalorder %s16, 0
    %p161 = por %p159, %p160
    %p162 = scmp.ne.s32.totalorder %s151, %s154
    %p163 = scmp.eq.s32.totalorder %s21, 1
    %p164 = por %p162, %p163
    %p165 = scmp.ne.s32.totalorder %s154, %s155
    %p166 = scmp.eq.s32.totalorder %s21, 0
    %p167 = por %p165, %p166
    %p168 = scmp.ne.s32.totalorder %s154, %s155
    %p169 = scmp.eq.s32.totalorder %s22, 1
    %p170 = por %p168, %p169
    %p172 = scmp.ne.s32.totalorder %s155, %s171
    %p173 = scmp.eq.s32.totalorder %s22, 0
    %p174 = por %p172, %p173
    %s175 = ssub.s32 %s16, %s23
    %p176 = scmp.eq.s32.totalorder %s175, 0
    %s178 = sadd.s32 %s177, 1
    %s179 = scalar_select %p176, %s177, %s178
    %p182 = pneg %p176
    %p183 = scmp.eq.s32.totalorder %s16, 1
    %p184 = por %p182, %p183
    %p185 = scmp.ne.s32.totalorder %s177, %s180
    %p186 = scmp.eq.s32.totalorder %s16, 0
    %p187 = por %p185, %p186
    %p188 = scmp.ne.s32.totalorder %s177, %s180
    %p189 = scmp.eq.s32.totalorder %s21, 1
    %p190 = por %p188, %p189
    %p191 = scmp.ne.s32.totalorder %s180, %s181
    %p192 = scmp.eq.s32.totalorder %s21, 0
    %p193 = por %p191, %p192
    %p194 = scmp.ne.s32.totalorder %s180, %s181
    %p195 = scmp.eq.s32.totalorder %s22, 1
    %p196 = por %p194, %p195
    %p198 = scmp.ne.s32.totalorder %s181, %s197
    %p199 = scmp.eq.s32.totalorder %s22, 0
    %p200 = por %p198, %p199
    %s201 = ssub.s32 %s16, %s23
    %p202 = scmp.eq.s32.totalorder %s201, 0
    %s204 = sadd.s32 %s203, 1
    %s205 = scalar_select %p202, %s203, %s204
    %p208 = pneg %p202
    %p209 = scmp.eq.s32.totalorder %s16, 1
    %p210 = por %p208, %p209
    %p211 = scmp.ne.s32.totalorder %s203, %s206
    %p212 = scmp.eq.s32.totalorder %s16, 0
    %p213 = por %p211, %p212
    %p214 = scmp.ne.s32.totalorder %s203, %s206
    %p215 = scmp.eq.s32.totalorder %s21, 1
    %p216 = por %p214, %p215
    %p217 = scmp.ne.s32.totalorder %s206, %s207
    %p218 = scmp.eq.s32.totalorder %s21, 0
    %p219 = por %p217, %p218
    %p220 = scmp.ne.s32.totalorder %s206, %s207
    %p221 = scmp.eq.s32.totalorder %s22, 1
    %p222 = por %p220, %p221
    %p224 = scmp.ne.s32.totalorder %s207, %s223
    %p225 = scmp.eq.s32.totalorder %s22, 0
    %p226 = por %p224, %p225
    %s227 = ssub.s32 %s16, %s23
    %p228 = scmp.eq.s32.totalorder %s227, 0
    %s230 = sadd.s32 %s229, 1
    %s231 = scalar_select %p228, %s229, %s230
    %p234 = pneg %p228
    %p235 = scmp.eq.s32.totalorder %s16, 1
    %p236 = por %p234, %p235
    %p237 = scmp.ne.s32.totalorder %s229, %s232
    %p238 = scmp.eq.s32.totalorder %s16, 0
    %p239 = por %p237, %p238
    %p240 = scmp.ne.s32.totalorder %s229, %s232
    %p241 = scmp.eq.s32.totalorder %s21, 1
    %p242 = por %p240, %p241
    %p243 = scmp.ne.s32.totalorder %s232, %s233
    %p244 = scmp.eq.s32.totalorder %s21, 0
    %p245 = por %p243, %p244
    %p246 = scmp.ne.s32.totalorder %s232, %s233
    %p247 = scmp.eq.s32.totalorder %s22, 1
    %p248 = por %p246, %p247
    %p250 = scmp.ne.s32.totalorder %s233, %s249
    %p251 = scmp.eq.s32.totalorder %s22, 0
    %p252 = por %p250, %p251
    %s253 = ssub.s32 %s16, %s23
    %p254 = scmp.eq.s32.totalorder %s253, 0
    %s256 = sadd.s32 %s255, 1
    %s257 = scalar_select %p254, %s255, %s256
    %p260 = pneg %p254
    %p261 = scmp.eq.s32.totalorder %s16, 1
    %p262 = por %p260, %p261
    %p263 = scmp.ne.s32.totalorder %s255, %s258
    %p264 = scmp.eq.s32.totalorder %s16, 0
    %p265 = por %p263, %p264
    %p266 = scmp.ne.s32.totalorder %s255, %s258
    %p267 = scmp.eq.s32.totalorder %s21, 1
    %p268 = por %p266, %p267
    %p269 = scmp.ne.s32.totalorder %s258, %s259
    %p270 = scmp.eq.s32.totalorder %s21, 0
    %p271 = por %p269, %p270
    %p272 = scmp.ne.s32.totalorder %s258, %s259
    %p273 = scmp.eq.s32.totalorder %s22, 1
    %p274 = por %p272, %p273
    %p276 = scmp.ne.s32.totalorder %s259, %s275
    %p277 = scmp.eq.s32.totalorder %s22, 0
    %p278 = por %p276, %p277
    %s280 = sadd.s32 %s279, 1
    %p283 = scmp.eq.s32.totalorder %s16, 1
    %p284 = scmp.ne.s32.totalorder %s279, %s281
    %p285 = scmp.eq.s32.totalorder %s16, 0
    %p286 = por %p284, %p285
    %p287 = scmp.ne.s32.totalorder %s279, %s281
    %p288 = scmp.eq.s32.totalorder %s21, 1
    %p289 = por %p287, %p288
    %p290 = scmp.ne.s32.totalorder %s281, %s282
    %p291 = scmp.eq.s32.totalorder %s21, 0
    %p292 = por %p290, %p291
    %p293 = scmp.ne.s32.totalorder %s281, %s282
    %p294 = scmp.eq.s32.totalorder %s22, 1
    %p295 = por %p293, %p294
    %p297 = scmp.ne.s32.totalorder %s282, %s296
    %p298 = scmp.eq.s32.totalorder %s22, 0
    %p299 = por %p297, %p298
    %p300 = scmp.le.s32.totalorder 1, %s16
    %p301 = scmp.lt.s32.totalorder %s16, 3
    %p302 = pnand %p300, %p301
    %p303 = pneg %p302
    // Predicated region
    $region9: #{transformer_lm_forward.2} parent=5 // pred_check
      _
    $region10: #{transformer_lm_forward.2} parent=5 // pred_check_branch
      %305 = sbr.rel (%p302) target = $region12
    $region11: #{transformer_lm_forward.2} parent=5 // pred_region
      %s306 = ssub.s32 %s16, 1
      // Predicated region
      $region13: #{transformer_lm_forward.2} parent=11 // pred_check
        %p307 = pneg %p37
      $region14: #{transformer_lm_forward.2} parent=11 // pred_check_branch
        %309 = sbr.rel (%p307) target = $region16
      $region15: #{transformer_lm_forward.2} parent=11 // pred_region
        _
      $region16: #{transformer_lm_forward.2} parent=11 // pred_fallthru
        _
    $region12: #{transformer_lm_forward.2} parent=5 // pred_fallthru
      _
    %p310 = scmp.lt.s32.totalorder %s16, 2
    // Predicated region
    $region17: #{transformer_lm_forward.2} parent=5 // pred_check
      %p311 = pneg %p310
    $region18: #{transformer_lm_forward.2} parent=5 // pred_check_branch
      %313 = sbr.rel (%p311) target = $region20
    $region19: #{transformer_lm_forward.2} parent=5 // pred_region
      // Predicated region
      $region21: #{transformer_lm_forward.2} parent=19 // pred_check
        %p314 = pneg %p57
      $region22: #{transformer_lm_forward.2} parent=19 // pred_check_branch
        %316 = sbr.rel (%p314) target = $region24
      $region23: #{transformer_lm_forward.2} parent=19 // pred_region
        %p317 = scmp.lt.s32.totalorder %s16, 1
        %s318 = scalar_select %p317, %s16, 1
        %s319 = smul.addr %s318, 4
        %s320 = scalar_lea.vmem %s1, %s319
      $region24: #{transformer_lm_forward.2} parent=19 // pred_fallthru
        _
      // Predicated region
      $region25: #{transformer_lm_forward.2} parent=19 // pred_check
        %p321 = pneg %p83
      $region26: #{transformer_lm_forward.2} parent=19 // pred_check_branch
        %323 = sbr.rel (%p321) target = $region28
      $region27: #{transformer_lm_forward.2} parent=19 // pred_region
        %p324 = scmp.lt.s32.totalorder %s16, 1
        %s325 = scalar_select %p324, %s16, 1
        %s326 = smul.addr %s325, 48
        %s327 = smul.addr %s326, 4
        %s328 = scalar_lea.vmem %s2, %s327
      $region28: #{transformer_lm_forward.2} parent=19 // pred_fallthru
        _
      // Predicated region
      $region29: #{transformer_lm_forward.2} parent=19 // pred_check
        %p329 = pneg %p109
      $region30: #{transformer_lm_forward.2} parent=19 // pred_check_branch
        %331 = sbr.rel (%p329) target = $region32
      $region31: #{transformer_lm_forward.2} parent=19 // pred_region
        %p332 = scmp.lt.s32.totalorder %s16, 1
        %s333 = scalar_select %p332, %s16, 1
        %s334 = smul.addr %s333, 3
        %s335 = scalar_lea.vmem %s3, %s334
      $region32: #{transformer_lm_forward.2} parent=19 // pred_fallthru
        _
      // Predicated region
      $region33: #{transformer_lm_forward.2} parent=19 // pred_check
        %p336 = pneg %p135
      $region34: #{transformer_lm_forward.2} parent=19 // pred_check_branch
        %338 = sbr.rel (%p336) target = $region36
      $region35: #{transformer_lm_forward.2} parent=19 // pred_region
        %p339 = scmp.lt.s32.totalorder %s16, 1
        %s340 = scalar_select %p339, %s16, 1
        %s341 = smul.addr %s340, 16
        %s342 = smul.addr %s341, 4
        %s343 = scalar_lea.vmem %s4, %s342
      $region36: #{transformer_lm_forward.2} parent=19 // pred_fallthru
        _
      // Predicated region
      $region37: #{transformer_lm_forward.2} parent=19 // pred_check
        %p344 = pneg %p161
      $region38: #{transformer_lm_forward.2} parent=19 // pred_check_branch
        %346 = sbr.rel (%p344) target = $region40
      $region39: #{transformer_lm_forward.2} parent=19 // pred_region
        %p347 = scmp.lt.s32.totalorder %s16, 1
        %s348 = scalar_select %p347, %s16, 1
        %s349 = scalar_lea.vmem %s5, %s348
      $region40: #{transformer_lm_forward.2} parent=19 // pred_fallthru
        _
      // Predicated region
      $region41: #{transformer_lm_forward.2} parent=19 // pred_check
        %p350 = pneg %p187
      $region42: #{transformer_lm_forward.2} parent=19 // pred_check_branch
        %352 = sbr.rel (%p350) target = $region44
      $region43: #{transformer_lm_forward.2} parent=19 // pred_region
        %p353 = scmp.lt.s32.totalorder %s16, 1
        %s354 = scalar_select %p353, %s16, 1
        %s355 = smul.addr %s354, 32
        %s356 = smul.addr %s355, 4
        %s357 = scalar_lea.vmem %s6, %s356
      $region44: #{transformer_lm_forward.2} parent=19 // pred_fallthru
        _
      // Predicated region
      $region45: #{transformer_lm_forward.2} parent=19 // pred_check
        %p358 = pneg %p213
      $region46: #{transformer_lm_forward.2} parent=19 // pred_check_branch
        %360 = sbr.rel (%p358) target = $region48
      $region47: #{transformer_lm_forward.2} parent=19 // pred_region
        %p361 = scmp.lt.s32.totalorder %s16, 1
        %s362 = scalar_select %p361, %s16, 1
        %s363 = smul.addr %s362, 2
        %s364 = scalar_lea.vmem %s7, %s363
      $region48: #{transformer_lm_forward.2} parent=19 // pred_fallthru
        _
      // Predicated region
      $region49: #{transformer_lm_forward.2} parent=19 // pred_check
        %p365 = pneg %p239
      $region50: #{transformer_lm_forward.2} parent=19 // pred_check_branch
        %367 = sbr.rel (%p365) target = $region52
      $region51: #{transformer_lm_forward.2} parent=19 // pred_region
        %p368 = scmp.lt.s32.totalorder %s16, 1
        %s369 = scalar_select %p368, %s16, 1
        %s370 = smul.addr %s369, 32
        %s371 = smul.addr %s370, 4
        %s372 = scalar_lea.vmem %s8, %s371
      $region52: #{transformer_lm_forward.2} parent=19 // pred_fallthru
        _
      // Predicated region
      $region53: #{transformer_lm_forward.2} parent=19 // pred_check
        %p373 = pneg %p265
      $region54: #{transformer_lm_forward.2} parent=19 // pred_check_branch
        %375 = sbr.rel (%p373) target = $region56
      $region55: #{transformer_lm_forward.2} parent=19 // pred_region
        %p376 = scmp.lt.s32.totalorder %s16, 1
        %s377 = scalar_select %p376, %s16, 1
        %s378 = scalar_lea.vmem %s9, %s377
      $region56: #{transformer_lm_forward.2} parent=19 // pred_fallthru
        _
    $region20: #{transformer_lm_forward.2} parent=5 // pred_fallthru
      _
    %p379 = scmp.le.s32.totalorder 1, %s16
    %p380 = scmp.lt.s32.totalorder %s16, 3
    %p381 = pnand %p379, %p380
    %p382 = pneg %p381
    // Predicated region
    $region57: #{transformer_lm_forward.2} parent=5 // pred_check
      _
    $region58: #{transformer_lm_forward.2} parent=5 // pred_check_branch
      %384 = sbr.rel (%p381) target = $region60
    $region59: #{transformer_lm_forward.2} parent=5 // pred_region
      %s385 = ssub.s32 %s16, 1
      %p386 = pneg %p37
      %p387 = pneg %p34
      %p388 = scmp.lt.s32.totalorder %s21, 1
      %s389 = scalar_select %p388, %s21, 1
      %s390 = smul.addr %s389, 4
      %s391 = scalar_lea.vmem %s1, %s390
      %p392 = pneg %p63
      %p393 = pneg %p60
      %p394 = scmp.lt.s32.totalorder %s21, 1
      %s395 = scalar_select %p394, %s21, 1
      %s396 = smul.addr %s395, 48
      %s397 = smul.addr %s396, 4
      %s398 = scalar_lea.vmem %s2, %s397
      %p399 = pneg %p89
      %p400 = pneg %p86
      %p401 = scmp.lt.s32.totalorder %s21, 1
      %s402 = scalar_select %p401, %s21, 1
      %s403 = smul.addr %s402, 3
      %s404 = scalar_lea.vmem %s3, %s403
      %p405 = pneg %p115
      %p406 = pneg %p112
      %p407 = scmp.lt.s32.totalorder %s21, 1
      %s408 = scalar_select %p407, %s21, 1
      %s409 = smul.addr %s408, 16
      %s410 = smul.addr %s409, 4
      %s411 = scalar_lea.vmem %s4, %s410
      %p412 = pneg %p141
      %p413 = pneg %p138
      %p414 = scmp.lt.s32.totalorder %s21, 1
      %s415 = scalar_select %p414, %s21, 1
      %s416 = scalar_lea.vmem %s5, %s415
      %p417 = pneg %p167
      %p418 = pneg %p164
      %p419 = scmp.lt.s32.totalorder %s21, 1
      %s420 = scalar_select %p419, %s21, 1
      %s421 = smul.addr %s420, 32
      %s422 = smul.addr %s421, 4
      %s423 = scalar_lea.vmem %s6, %s422
      %p424 = pneg %p193
      %p425 = pneg %p190
      %p426 = scmp.lt.s32.totalorder %s21, 1
      %s427 = scalar_select %p426, %s21, 1
      %s428 = smul.addr %s427, 2
      %s429 = scalar_lea.vmem %s7, %s428
      %p430 = pneg %p219
      %p431 = pneg %p216
      %p432 = scmp.lt.s32.totalorder %s21, 1
      %s433 = scalar_select %p432, %s21, 1
      %s434 = smul.addr %s433, 32
      %s435 = smul.addr %s434, 4
      %s436 = scalar_lea.vmem %s8, %s435
      %p437 = pneg %p245
      %p438 = pneg %p242
      %p439 = scmp.lt.s32.totalorder %s21, 1
      %s440 = scalar_select %p439, %s21, 1
      %s441 = scalar_lea.vmem %s9, %s440
      %p442 = pneg %p271
      %p443 = pneg %p268
      %p444 = pneg %p292
      %p445 = pneg %p289
      %p446 = scmp.lt.s32.totalorder %s21, 1
      %s447 = scalar_select %p446, %s21, 1
      %s448 = smul.addr %s447, 4
      %s449 = scalar_lea.vmem %s1, %s448
      %p450 = scmp.lt.s32.totalorder %s21, 1
      %s451 = scalar_select %p450, %s21, 1
      %s452 = smul.addr %s451, 48
      %s453 = smul.addr %s452, 4
      %s454 = scalar_lea.vmem %s2, %s453
      %p455 = scmp.lt.s32.totalorder %s21, 1
      %s456 = scalar_select %p455, %s21, 1
      %s457 = smul.addr %s456, 3
      %s458 = scalar_lea.vmem %s3, %s457
      %p459 = scmp.lt.s32.totalorder %s21, 1
      %s460 = scalar_select %p459, %s21, 1
      %s461 = smul.addr %s460, 16
      %s462 = smul.addr %s461, 4
      %s463 = scalar_lea.vmem %s4, %s462
      %p464 = scmp.lt.s32.totalorder %s21, 1
      %s465 = scalar_select %p464, %s21, 1
      %s466 = scalar_lea.vmem %s5, %s465
      %p467 = scmp.lt.s32.totalorder %s21, 1
      %s468 = scalar_select %p467, %s21, 1
      %s469 = smul.addr %s468, 32
      %s470 = smul.addr %s469, 4
      %s471 = scalar_lea.vmem %s6, %s470
      %p472 = scmp.lt.s32.totalorder %s21, 1
      %s473 = scalar_select %p472, %s21, 1
      %s474 = smul.addr %s473, 2
      %s475 = scalar_lea.vmem %s7, %s474
      %p476 = scmp.lt.s32.totalorder %s21, 1
      %s477 = scalar_select %p476, %s21, 1
      %s478 = smul.addr %s477, 32
      %s479 = smul.addr %s478, 4
      %s480 = scalar_lea.vmem %s8, %s479
      %p481 = scmp.lt.s32.totalorder %s21, 1
      %s482 = scalar_select %p481, %s21, 1
      %s483 = scalar_lea.vmem %s9, %s482
      %p485 = scmp.eq.s32.totalorder %s21, 0
      // Predicated region
      $region61: #{transformer_lm_forward.2} parent=59 // pred_check
        %p486 = pneg %p485
      $region62: #{transformer_lm_forward.2} parent=59 // pred_check_branch
        %488 = sbr.rel (%p486) target = $region64
      $region63: #{transformer_lm_forward.2} parent=59 // pred_region
        %v489 = vld [vmem:[%s0] sm:$0xff]
        %v490 = vld [vmem:[%s0 + $0x8] sm:$0xff]
        %491 = vst [vmem:[%s10] sm:$0xff] %v489
        %492 = vst [vmem:[%s10 + $0x8] sm:$0xff] %v490
      $region64: #{transformer_lm_forward.2} parent=59 // pred_fallthru
        _
      %v493 = vld [vmem:[%s10] sm:$0xff]
      %v494 = vld [vmem:[%s10 + $0x8] sm:$0xff]
      %v495 = vld [vmem:[%s449] sm:$0xf]
      %496 = vadd.xlane.f32.xlu0 %v493
      %v497 = vpop.xlane.xlu0 %496
      %498 = vadd.xlane.f32.xlu0 %v494
      %v499 = vpop.xlane.xlu0 %498
      %v500 = vrcp.pop 128.0
      %v501 = vmul.f32 128.0, %v500
      %v502 = vsub.f32 1.0, %v501
      %v503 = vmul.f32 %v500, %v502
      %v504 = vadd.f32 %v500, %v503
      %vm505 = vweird.f32 %v500
      %v506 = vsel %vm505, %v500, %v504
      %v507 = vmul.f32 %v497, %v506
      %v508 = vmul.f32 %v499, %v506
      %v509 = vsub.f32 %v493, %v507
      %v510 = vsub.f32 %v494, %v508
      %v511 = vmul.f32 %v509, %v509
      %v512 = vmul.f32 %v510, %v510
      %513 = vadd.xlane.f32.xlu0 %v511
      %v514 = vpop.xlane.xlu0 %513
      %515 = vadd.xlane.f32.xlu0 %v512
      %v516 = vpop.xlane.xlu0 %515
      %v517 = vmul.f32 %v514, %v506
      %v518 = vmul.f32 %v516, %v506
      %v519 = vadd.f32 %v517, 1e-12
      %v520 = vadd.f32 %v518, 1e-12
      %v521 = vrsqrt.pop %v519
      %v522 = vmul.f32 %v521, %v519
      %v523 = vmul.f32 %v522, %v521
      %v524 = vmul.f32 0.5, %v523
      %v525 = vsub.f32 1.5, %v524
      %v526 = vmul.f32 %v521, %v525
      %vm527 = vweird.f32 %v519
      %vm528 = vweird.f32 %v521
      %vm529 = vmor %vm527, %vm528
      %v530 = vsel %vm529, %v521, %v526
      %v531 = vrsqrt.pop %v520
      %v532 = vmul.f32 %v531, %v520
      %v533 = vmul.f32 %v532, %v531
      %v534 = vmul.f32 0.5, %v533
      %v535 = vsub.f32 1.5, %v534
      %v536 = vmul.f32 %v531, %v535
      %vm537 = vweird.f32 %v520
      %vm538 = vweird.f32 %v531
      %vm539 = vmor %vm537, %vm538
      %v540 = vsel %vm539, %v531, %v536
      %v541 = vmul.f32 %v509, %v530
      %v542 = vmul.f32 %v510, %v540
      %v543 = vperm.slane %v495, 0
      %v544 = vmul.f32 %v541, %v543
      %v545 = vmul.f32 %v542, %v543
      %v546 = vperm.slane %v495, 1
      %v547 = vadd.f32 %v544, %v546
      %v548 = vadd.f32 %v545, %v546
      %v549 = vpack.c.bf16 %v548, %v547
      %v550 = vld [vmem:[%s454] sm:$0xff]
      %v551 = vld [vmem:[%s454 + $0x8] sm:$0xf]
      %v552 = vld [vmem:[%s454 + $0xc] sm:$0xff]
      %v553 = vld [vmem:[%s454 + $0x14] sm:$0xf]
      %v554 = vld [vmem:[%s454 + $0x18] sm:$0xff]
      %v555 = vld [vmem:[%s454 + $0x20] sm:$0xf]
      %v556 = vld [vmem:[%s454 + $0x24] sm:$0xff]
      %v557 = vld [vmem:[%s454 + $0x2c] sm:$0xf]
      %v558 = vld [vmem:[%s454 + $0x30] sm:$0xff]
      %v559 = vld [vmem:[%s454 + $0x38] sm:$0xf]
      %v560 = vld [vmem:[%s454 + $0x3c] sm:$0xff]
      %v561 = vld [vmem:[%s454 + $0x44] sm:$0xf]
      %v562 = vld [vmem:[%s454 + $0x48] sm:$0xff]
      %v563 = vld [vmem:[%s454 + $0x50] sm:$0xf]
      %v564 = vld [vmem:[%s454 + $0x54] sm:$0xff]
      %v565 = vld [vmem:[%s454 + $0x5c] sm:$0xf]
      %v566 = vld [vmem:[%s454 + $0x60] sm:$0xff]
      %v567 = vld [vmem:[%s454 + $0x68] sm:$0xf]
      %v568 = vld [vmem:[%s454 + $0x6c] sm:$0xff]
      %v569 = vld [vmem:[%s454 + $0x74] sm:$0xf]
      %v570 = vld [vmem:[%s454 + $0x78] sm:$0xff]
      %v571 = vld [vmem:[%s454 + $0x80] sm:$0xf]
      %v572 = vld [vmem:[%s454 + $0x84] sm:$0xff]
      %v573 = vld [vmem:[%s454 + $0x8c] sm:$0xf]
      %v574 = vld [vmem:[%s454 + $0x90] sm:$0xff]
      %v575 = vld [vmem:[%s454 + $0x98] sm:$0xf]
      %v576 = vld [vmem:[%s454 + $0x9c] sm:$0xff]
      %v577 = vld [vmem:[%s454 + $0xa4] sm:$0xf]
      %v578 = vld [vmem:[%s454 + $0xa8] sm:$0xff]
      %v579 = vld [vmem:[%s454 + $0xb0] sm:$0xf]
      %v580 = vld [vmem:[%s454 + $0xb4] sm:$0xff]
      %v581 = vld [vmem:[%s454 + $0xbc] sm:$0xf]
      %v582 = vld [vmem:[%s458] sm:$0x7]
      %v584 = vperm.slane %v582, 0
      %v585 = vperm.slane %v582, 1
      %v586 = vperm.slane %v582, 2
      %v622 = vunpack.c.l.b16 %v550
      %v623 = vunpack.c.h.b16 %v550
      %v624 = vunpack.c.l.b16 %v551
      %v625 = vunpack.c.l.b16 %v552
      %v626 = vunpack.c.h.b16 %v552
      %v627 = vunpack.c.l.b16 %v553
      %v628 = vunpack.c.l.b16 %v554
      %v629 = vunpack.c.h.b16 %v554
      %v630 = vunpack.c.l.b16 %v555
      %v631 = vunpack.c.l.b16 %v556
      %v632 = vunpack.c.h.b16 %v556
      %v633 = vunpack.c.l.b16 %v557
      %v634 = vunpack.c.l.b16 %v558
      %v635 = vunpack.c.h.b16 %v558
      %v636 = vunpack.c.l.b16 %v559
      %v637 = vunpack.c.l.b16 %v560
      %v638 = vunpack.c.h.b16 %v560
      %v639 = vunpack.c.l.b16 %v561
      %v640 = vunpack.c.l.b16 %v562
      %v641 = vunpack.c.h.b16 %v562
      %v642 = vunpack.c.l.b16 %v563
      %v643 = vunpack.c.l.b16 %v564
      %v644 = vunpack.c.h.b16 %v564
      %v645 = vunpack.c.l.b16 %v565
      %v646 = vunpack.c.l.b16 %v566
      %v647 = vunpack.c.h.b16 %v566
      %v648 = vunpack.c.l.b16 %v567
      %v649 = vunpack.c.l.b16 %v568
      %v650 = vunpack.c.h.b16 %v568
      %v651 = vunpack.c.l.b16 %v569
      %v652 = vunpack.c.l.b16 %v570
      %v653 = vunpack.c.h.b16 %v570
      %v654 = vunpack.c.l.b16 %v571
      %v655 = vunpack.c.l.b16 %v572
      %v656 = vunpack.c.h.b16 %v572
      %v657 = vunpack.c.l.b16 %v573
      %v658 = vunpack.c.l.b16 %v574
      %v659 = vunpack.c.h.b16 %v574
      %v660 = vunpack.c.l.b16 %v575
      %v661 = vunpack.c.l.b16 %v576
      %v662 = vunpack.c.h.b16 %v576
      %v663 = vunpack.c.l.b16 %v577
      %v664 = vunpack.c.l.b16 %v578
      %v665 = vunpack.c.h.b16 %v578
      %v666 = vunpack.c.l.b16 %v579
      %v667 = vunpack.c.l.b16 %v580
      %v668 = vunpack.c.h.b16 %v580
      %v669 = vunpack.c.l.b16 %v581
      %v670 = vpack.c.b16 %v625, %v622
      %v671 = vpack.c.b16 %v626, %v623
      %v672 = vpack.c.b16 %v627, %v624
      %v673 = vpack.c.b16 %v631, %v628
      %v674 = vpack.c.b16 %v632, %v629
      %v675 = vpack.c.b16 %v633, %v630
      %v676 = vpack.c.b16 %v637, %v634
      %v677 = vpack.c.b16 %v638, %v635
      %v678 = vpack.c.b16 %v639, %v636
      %v679 = vpack.c.b16 %v643, %v640
      %v680 = vpack.c.b16 %v644, %v641
      %v681 = vpack.c.b16 %v645, %v642
      %v682 = vpack.c.b16 %v649, %v646
      %v683 = vpack.c.b16 %v650, %v647
      %v684 = vpack.c.b16 %v651, %v648
      %v685 = vpack.c.b16 %v655, %v652
      %v686 = vpack.c.b16 %v656, %v653
      %v687 = vpack.c.b16 %v657, %v654
      %v688 = vpack.c.b16 %v661, %v658
      %v689 = vpack.c.b16 %v662, %v659
      %v690 = vpack.c.b16 %v663, %v660
      %v691 = vpack.c.b16 %v667, %v664
      %v692 = vpack.c.b16 %v668, %v665
      %v693 = vpack.c.b16 %v669, %v666
      %718 = vmatpush.bf16.msra.mxu0 %v691
      %719 = vmatpush.bf16.msra.mxu0 %v688
      %720 = vmatpush.bf16.msra.mxu0 %v685
      %721 = vmatpush.bf16.msra.mxu0 %v682
      %722 = vmatpush.bf16.msra.mxu0 %v679
      %723 = vmatpush.bf16.msra.mxu0 %v676
      %724 = vmatpush.bf16.msra.mxu0 %v673
      %725 = vmatpush.bf16.msra.mxu0 %v670
      %726 = vmatmul.bf16.gmra.mxu0 %v549
      %v727 = vpop.f32.mrf.mxu0
      %v728 = vadd.f32 %v584, %v727
      %v729 = vpop.f32.mrf.mxu0
      %v730 = vadd.f32 %v584, %v729
      %731 = vdwg.mxu0
      %732 = vmatpush.bf16.msra.mxu0 %v692
      %733 = vmatpush.bf16.msra.mxu0 %v689
      %734 = vmatpush.bf16.msra.mxu0 %v686
      %735 = vmatpush.bf16.msra.mxu0 %v683
      %736 = vmatpush.bf16.msra.mxu0 %v680
      %737 = vmatpush.bf16.msra.mxu0 %v677
      %738 = vmatpush.bf16.msra.mxu0 %v674
      %739 = vmatpush.bf16.msra.mxu0 %v671
      %740 = vmatmul.bf16.gmra.mxu0 %v549
      %v741 = vpop.f32.mrf.mxu0
      %v742 = vadd.f32 %v585, %v741
      %v743 = vpop.f32.mrf.mxu0
      %v744 = vadd.f32 %v585, %v743
      %745 = vdwg.mxu0
      %746 = vmatpush.bf16.msra.mxu0 %v693
      %747 = vmatpush.bf16.msra.mxu0 %v690
      %748 = vmatpush.bf16.msra.mxu0 %v687
      %749 = vmatpush.bf16.msra.mxu0 %v684
      %750 = vmatpush.bf16.msra.mxu0 %v681
      %751 = vmatpush.bf16.msra.mxu0 %v678
      %752 = vmatpush.bf16.msra.mxu0 %v675
      %753 = vmatpush.bf16.msra.mxu0 %v672
      %754 = vmatmul.bf16.gmra.mxu0 %v549
      %v755 = vpop.f32.mrf.mxu0
      %v756 = vadd.f32 %v586, %v755
      %v757 = vpop.f32.mrf.mxu0
      %v758 = vadd.f32 %v586, %v757
      %759 = vdwg.mxu0
      %762 = vrot.lane.b32.xlu0 %v728, 96
      %v763 = vpop.permute.xlu0 %762
      %764 = vrot.lane.b32.xlu0 %v730, 96
      %v765 = vpop.permute.xlu0 %764
      %768 = vrot.lane.b32.xlu0 %v728, 64
      %v769 = vpop.permute.xlu0 %768
      %770 = vrot.lane.b32.xlu0 %v730, 64
      %v771 = vpop.permute.xlu0 %770
      %774 = vrot.lane.b32.xlu0 %v728, 32
      %v775 = vpop.permute.xlu0 %774
      %776 = vrot.lane.b32.xlu0 %v730, 32
      %v777 = vpop.permute.xlu0 %776
      %v780 = vpack.c.bf16 %v728, %v728
      %v781 = vpack.c.bf16 %v730, %v730
      %v782 = vpack.c.bf16 %v763, %v763
      %v783 = vpack.c.bf16 %v765, %v765
      %v784 = vpack.c.bf16 %v769, %v769
      %v785 = vpack.c.bf16 %v771, %v771
      %v786 = vpack.c.bf16 %v775, %v775
      %v787 = vpack.c.bf16 %v777, %v777
      %790 = vrot.lane.b32.xlu0 %v742, 96
      %v791 = vpop.permute.xlu0 %790
      %792 = vrot.lane.b32.xlu0 %v744, 96
      %v793 = vpop.permute.xlu0 %792
      %796 = vrot.lane.b32.xlu0 %v742, 64
      %v797 = vpop.permute.xlu0 %796
      %798 = vrot.lane.b32.xlu0 %v744, 64
      %v799 = vpop.permute.xlu0 %798
      %802 = vrot.lane.b32.xlu0 %v742, 32
      %v803 = vpop.permute.xlu0 %802
      %804 = vrot.lane.b32.xlu0 %v744, 32
      %v805 = vpop.permute.xlu0 %804
      %v808 = vpack.c.bf16 %v742, %v742
      %v809 = vpack.c.bf16 %v744, %v744
      %v810 = vpack.c.bf16 %v791, %v791
      %v811 = vpack.c.bf16 %v793, %v793
      %v812 = vpack.c.bf16 %v797, %v797
      %v813 = vpack.c.bf16 %v799, %v799
      %v814 = vpack.c.bf16 %v803, %v803
      %v815 = vpack.c.bf16 %v805, %v805
      %818 = vrot.lane.b32.xlu0 %v756, 96
      %v819 = vpop.permute.xlu0 %818
      %820 = vrot.lane.b32.xlu0 %v758, 96
      %v821 = vpop.permute.xlu0 %820
      %824 = vrot.lane.b32.xlu0 %v756, 64
      %v825 = vpop.permute.xlu0 %824
      %826 = vrot.lane.b32.xlu0 %v758, 64
      %v827 = vpop.permute.xlu0 %826
      %830 = vrot.lane.b32.xlu0 %v756, 32
      %v831 = vpop.permute.xlu0 %830
      %832 = vrot.lane.b32.xlu0 %v758, 32
      %v833 = vpop.permute.xlu0 %832
      %v836 = vpack.c.bf16 %v756, %v756
      %v837 = vpack.c.bf16 %v758, %v758
      %v838 = vpack.c.bf16 %v819, %v819
      %v839 = vpack.c.bf16 %v821, %v821
      %v840 = vpack.c.bf16 %v825, %v825
      %v841 = vpack.c.bf16 %v827, %v827
      %v842 = vpack.c.bf16 %v831, %v831
      %v843 = vpack.c.bf16 %v833, %v833
      %v844 = vlaneseq
      %v845 = vshrl.u32 %v844, 7
      %v846 = vlaneseq
      %v847 = vand.u32 %v846, 127
      %vm848 = vcmp.gt.s32.totalorder %v847, %v845
      %v849 = vsel %vm848, -1e+30, 0.0
      %vm850 = vcmask 261120
      %v852 = vsel %vm850, %v780, 0
      %v855 = vsel %vm850, %v808, 0
      %857 = vmatpush.bf16.xpose.msra.mxu0 0
      %858 = vmatpush.bf16.xpose.msra.mxu0 0
      %859 = vmatpush.bf16.xpose.msra.mxu0 0
      %860 = vmatpush.bf16.xpose.msra.mxu0 0
      %861 = vmatpush.bf16.xpose.msra.mxu0 0
      %862 = vmatpush.bf16.xpose.msra.mxu0 0
      %863 = vmatpush.bf16.xpose.msra.mxu0 0
      %864 = vmatpush.bf16.xpose.msra.mxu0 %v855
      %865 = vmatmul.bf16.gmra.mxu0 %v852
      %v866 = vpop.f32.mrf.mxu0
      %v867 = vadd.f32 %v849, %v866
      %v868 = vpop.f32.mrf.mxu0
      %869 = vdwg.mxu0
      %v871 = vsel %vm850, %v781, 0
      %v874 = vsel %vm850, %v809, 0
      %876 = vmatpush.bf16.xpose.msra.mxu0 0
      %877 = vmatpush.bf16.xpose.msra.mxu0 0
      %878 = vmatpush.bf16.xpose.msra.mxu0 0
      %879 = vmatpush.bf16.xpose.msra.mxu0 0
      %880 = vmatpush.bf16.xpose.msra.mxu0 0
      %881 = vmatpush.bf16.xpose.msra.mxu0 0
      %882 = vmatpush.bf16.xpose.msra.mxu0 0
      %883 = vmatpush.bf16.xpose.msra.mxu0 %v874
      %884 = vmatmul.bf16.gmra.mxu0 %v871
      %v885 = vpop.f32.mrf.mxu0
      %v886 = vadd.f32 %v849, %v885
      %v887 = vpop.f32.mrf.mxu0
      %888 = vdwg.mxu0
      %v890 = vsel %vm850, %v782, 0
      %v893 = vsel %vm850, %v810, 0
      %895 = vmatpush.bf16.xpose.msra.mxu0 0
      %896 = vmatpush.bf16.xpose.msra.mxu0 0
      %897 = vmatpush.bf16.xpose.msra.mxu0 0
      %898 = vmatpush.bf16.xpose.msra.mxu0 0
      %899 = vmatpush.bf16.xpose.msra.mxu0 0
      %900 = vmatpush.bf16.xpose.msra.mxu0 0
      %901 = vmatpush.bf16.xpose.msra.mxu0 0
      %902 = vmatpush.bf16.xpose.msra.mxu0 %v893
      %903 = vmatmul.bf16.gmra.mxu0 %v890
      %v904 = vpop.f32.mrf.mxu0
      %v905 = vadd.f32 %v849, %v904
      %v906 = vpop.f32.mrf.mxu0
      %907 = vdwg.mxu0
      %v909 = vsel %vm850, %v783, 0
      %v912 = vsel %vm850, %v811, 0
      %914 = vmatpush.bf16.xpose.msra.mxu0 0
      %915 = vmatpush.bf16.xpose.msra.mxu0 0
      %916 = vmatpush.bf16.xpose.msra.mxu0 0
      %917 = vmatpush.bf16.xpose.msra.mxu0 0
      %918 = vmatpush.bf16.xpose.msra.mxu0 0
      %919 = vmatpush.bf16.xpose.msra.mxu0 0
      %920 = vmatpush.bf16.xpose.msra.mxu0 0
      %921 = vmatpush.bf16.xpose.msra.mxu0 %v912
      %922 = vmatmul.bf16.gmra.mxu0 %v909
      %v923 = vpop.f32.mrf.mxu0
      %v924 = vadd.f32 %v849, %v923
      %v925 = vpop.f32.mrf.mxu0
      %926 = vdwg.mxu0
      %v928 = vsel %vm850, %v784, 0
      %v931 = vsel %vm850, %v812, 0
      %933 = vmatpush.bf16.xpose.msra.mxu0 0
      %934 = vmatpush.bf16.xpose.msra.mxu0 0
      %935 = vmatpush.bf16.xpose.msra.mxu0 0
      %936 = vmatpush.bf16.xpose.msra.mxu0 0
      %937 = vmatpush.bf16.xpose.msra.mxu0 0
      %938 = vmatpush.bf16.xpose.msra.mxu0 0
      %939 = vmatpush.bf16.xpose.msra.mxu0 0
      %940 = vmatpush.bf16.xpose.msra.mxu0 %v931
      %941 = vmatmul.bf16.gmra.mxu0 %v928
      %v942 = vpop.f32.mrf.mxu0
      %v943 = vadd.f32 %v849, %v942
      %v944 = vpop.f32.mrf.mxu0
      %945 = vdwg.mxu0
      %v947 = vsel %vm850, %v785, 0
      %v950 = vsel %vm850, %v813, 0
      %952 = vmatpush.bf16.xpose.msra.mxu0 0
      %953 = vmatpush.bf16.xpose.msra.mxu0 0
      %954 = vmatpush.bf16.xpose.msra.mxu0 0
      %955 = vmatpush.bf16.xpose.msra.mxu0 0
      %956 = vmatpush.bf16.xpose.msra.mxu0 0
      %957 = vmatpush.bf16.xpose.msra.mxu0 0
      %958 = vmatpush.bf16.xpose.msra.mxu0 0
      %959 = vmatpush.bf16.xpose.msra.mxu0 %v950
      %960 = vmatmul.bf16.gmra.mxu0 %v947
      %v961 = vpop.f32.mrf.mxu0
      %v962 = vadd.f32 %v849, %v961
      %v963 = vpop.f32.mrf.mxu0
      %964 = vdwg.mxu0
      %v966 = vsel %vm850, %v786, 0
      %v969 = vsel %vm850, %v814, 0
      %971 = vmatpush.bf16.xpose.msra.mxu0 0
      %972 = vmatpush.bf16.xpose.msra.mxu0 0
      %973 = vmatpush.bf16.xpose.msra.mxu0 0
      %974 = vmatpush.bf16.xpose.msra.mxu0 0
      %975 = vmatpush.bf16.xpose.msra.mxu0 0
      %976 = vmatpush.bf16.xpose.msra.mxu0 0
      %977 = vmatpush.bf16.xpose.msra.mxu0 0
      %978 = vmatpush.bf16.xpose.msra.mxu0 %v969
      %979 = vmatmul.bf16.gmra.mxu0 %v966
      %v980 = vpop.f32.mrf.mxu0
      %v981 = vadd.f32 %v849, %v980
      %v982 = vpop.f32.mrf.mxu0
      %983 = vdwg.mxu0
      %v985 = vsel %vm850, %v787, 0
      %v988 = vsel %vm850, %v815, 0
      %990 = vmatpush.bf16.xpose.msra.mxu0 0
      %991 = vmatpush.bf16.xpose.msra.mxu0 0
      %992 = vmatpush.bf16.xpose.msra.mxu0 0
      %993 = vmatpush.bf16.xpose.msra.mxu0 0
      %994 = vmatpush.bf16.xpose.msra.mxu0 0
      %995 = vmatpush.bf16.xpose.msra.mxu0 0
      %996 = vmatpush.bf16.xpose.msra.mxu0 0
      %997 = vmatpush.bf16.xpose.msra.mxu0 %v988
      %998 = vmatmul.bf16.gmra.mxu0 %v985
      %v999 = vpop.f32.mrf.mxu0
      %v1000 = vadd.f32 %v849, %v999
      %v1001 = vpop.f32.mrf.mxu0
      %1002 = vdwg.mxu0
      %vm1003 = vcmask 64512
      %v1004 = vsel %vm1003, %v867, -inf
      %1005 = vmax.xlane.f32.xlu0 %v1004
      %v1006 = vpop.xlane.xlu0 %1005
      %v1007 = vsel %vm1003, %v886, -inf
      %1008 = vmax.xlane.f32.xlu0 %v1007
      %v1009 = vpop.xlane.xlu0 %1008
      %v1010 = vsel %vm1003, %v905, -inf
      %1011 = vmax.xlane.f32.xlu0 %v1010
      %v1012 = vpop.xlane.xlu0 %1011
      %v1013 = vsel %vm1003, %v924, -inf
      %1014 = vmax.xlane.f32.xlu0 %v1013
      %v1015 = vpop.xlane.xlu0 %1014
      %v1016 = vsel %vm1003, %v943, -inf
      %1017 = vmax.xlane.f32.xlu0 %v1016
      %v1018 = vpop.xlane.xlu0 %1017
      %v1019 = vsel %vm1003, %v962, -inf
      %1020 = vmax.xlane.f32.xlu0 %v1019
      %v1021 = vpop.xlane.xlu0 %1020
      %v1022 = vsel %vm1003, %v981, -inf
      %1023 = vmax.xlane.f32.xlu0 %v1022
      %v1024 = vpop.xlane.xlu0 %1023
      %v1025 = vsel %vm1003, %v1000, -inf
      %1026 = vmax.xlane.f32.xlu0 %v1025
      %v1027 = vpop.xlane.xlu0 %1026
      %v1028 = vsub.f32 %v867, %v1006
      %v1029 = vsub.f32 %v886, %v1009
      %v1030 = vsub.f32 %v905, %v1012
      %v1031 = vsub.f32 %v924, %v1015
      %v1032 = vsub.f32 %v943, %v1018
      %v1033 = vsub.f32 %v962, %v1021
      %v1034 = vsub.f32 %v981, %v1024
      %v1035 = vsub.f32 %v1000, %v1027
      %v1036 = vmul.f32 %v1028, 1.442695
      %v1037 = vpow.pop %v1036
      %v1038 = vmul.f32 %v1029, 1.442695
      %v1039 = vpow.pop %v1038
      %v1040 = vmul.f32 %v1030, 1.442695
      %v1041 = vpow.pop %v1040
      %v1042 = vmul.f32 %v1031, 1.442695
      %v1043 = vpow.pop %v1042
      %v1044 = vmul.f32 %v1032, 1.442695
      %v1045 = vpow.pop %v1044
      %v1046 = vmul.f32 %v1033, 1.442695
      %v1047 = vpow.pop %v1046
      %v1048 = vmul.f32 %v1034, 1.442695
      %v1049 = vpow.pop %v1048
      %v1050 = vmul.f32 %v1035, 1.442695
      %v1051 = vpow.pop %v1050
      %v1052 = vsel %vm1003, %v1037, 0.0
      %1053 = vadd.xlane.f32.xlu0 %v1052
      %v1054 = vpop.xlane.xlu0 %1053
      %v1055 = vsel %vm1003, %v1039, 0.0
      %1056 = vadd.xlane.f32.xlu0 %v1055
      %v1057 = vpop.xlane.xlu0 %1056
      %v1058 = vsel %vm1003, %v1041, 0.0
      %1059 = vadd.xlane.f32.xlu0 %v1058
      %v1060 = vpop.xlane.xlu0 %1059
      %v1061 = vsel %vm1003, %v1043, 0.0
      %1062 = vadd.xlane.f32.xlu0 %v1061
      %v1063 = vpop.xlane.xlu0 %1062
      %v1064 = vsel %vm1003, %v1045, 0.0
      %1065 = vadd.xlane.f32.xlu0 %v1064
      %v1066 = vpop.xlane.xlu0 %1065
      %v1067 = vsel %vm1003, %v1047, 0.0
      %1068 = vadd.xlane.f32.xlu0 %v1067
      %v1069 = vpop.xlane.xlu0 %1068
      %v1070 = vsel %vm1003, %v1049, 0.0
      %1071 = vadd.xlane.f32.xlu0 %v1070
      %v1072 = vpop.xlane.xlu0 %1071
      %v1073 = vsel %vm1003, %v1051, 0.0
      %1074 = vadd.xlane.f32.xlu0 %v1073
      %v1075 = vpop.xlane.xlu0 %1074
      %v1076 = vrcp.pop %v1054
      %v1077 = vrcp.pop %v1057
      %v1078 = vrcp.pop %v1060
      %v1079 = vrcp.pop %v1063
      %v1080 = vrcp.pop %v1066
      %v1081 = vrcp.pop %v1069
      %v1082 = vrcp.pop %v1072
      %v1083 = vrcp.pop %v1075
      %v1084 = vmul.f32 %v1037, %v1076
      %v1085 = vmul.f32 %v1039, %v1077
      %v1086 = vmul.f32 %v1041, %v1078
      %v1087 = vmul.f32 %v1043, %v1079
      %v1088 = vmul.f32 %v1045, %v1080
      %v1089 = vmul.f32 %v1047, %v1081
      %v1090 = vmul.f32 %v1049, %v1082
      %v1091 = vmul.f32 %v1051, %v1083
      %v1092 = vpack.c.bf16 %v1084, %v1084
      %v1093 = vpack.c.bf16 %v1085, %v1085
      %v1094 = vpack.c.bf16 %v1086, %v1086
      %v1095 = vpack.c.bf16 %v1087, %v1087
      %v1096 = vpack.c.bf16 %v1088, %v1088
      %v1097 = vpack.c.bf16 %v1089, %v1089
      %v1098 = vpack.c.bf16 %v1090, %v1090
      %v1099 = vpack.c.bf16 %v1091, %v1091
      %v1101 = vsel %vm1003, %v1092, 0
      %vm1103 = vcmask 1043456
      %v1105 = vsel %vm1103, %v836, 0
      %1107 = vmatpush.bf16.msra.mxu0 0
      %1108 = vmatpush.bf16.msra.mxu0 0
      %1109 = vmatpush.bf16.msra.mxu0 0
      %1110 = vmatpush.bf16.msra.mxu0 0
      %1111 = vmatpush.bf16.msra.mxu0 0
      %1112 = vmatpush.bf16.msra.mxu0 0
      %1113 = vmatpush.bf16.msra.mxu0 0
      %1114 = vmatpush.bf16.msra.mxu0 %v1105
      %1115 = vmatmul.bf16.gmra.mxu0 %v1101
      %v1116 = vpop.f32.mrf.mxu0
      %v1117 = vadd.f32 0.0, %v1116
      %v1118 = vpop.f32.mrf.mxu0
      %1119 = vdwg.mxu0
      %v1121 = vsel %vm1003, %v1093, 0
      %v1124 = vsel %vm1103, %v837, 0
      %1126 = vmatpush.bf16.msra.mxu0 0
      %1127 = vmatpush.bf16.msra.mxu0 0
      %1128 = vmatpush.bf16.msra.mxu0 0
      %1129 = vmatpush.bf16.msra.mxu0 0
      %1130 = vmatpush.bf16.msra.mxu0 0
      %1131 = vmatpush.bf16.msra.mxu0 0
      %1132 = vmatpush.bf16.msra.mxu0 0
      %1133 = vmatpush.bf16.msra.mxu0 %v1124
      %1134 = vmatmul.bf16.gmra.mxu0 %v1121
      %v1135 = vpop.f32.mrf.mxu0
      %v1136 = vadd.f32 0.0, %v1135
      %v1137 = vpop.f32.mrf.mxu0
      %1138 = vdwg.mxu0
      %v1140 = vsel %vm1003, %v1094, 0
      %v1143 = vsel %vm1103, %v838, 0
      %1145 = vmatpush.bf16.msra.mxu0 0
      %1146 = vmatpush.bf16.msra.mxu0 0
      %1147 = vmatpush.bf16.msra.mxu0 0
      %1148 = vmatpush.bf16.msra.mxu0 0
      %1149 = vmatpush.bf16.msra.mxu0 0
      %1150 = vmatpush.bf16.msra.mxu0 0
      %1151 = vmatpush.bf16.msra.mxu0 0
      %1152 = vmatpush.bf16.msra.mxu0 %v1143
      %1153 = vmatmul.bf16.gmra.mxu0 %v1140
      %v1154 = vpop.f32.mrf.mxu0
      %v1155 = vadd.f32 0.0, %v1154
      %v1156 = vpop.f32.mrf.mxu0
      %1157 = vdwg.mxu0
      %v1159 = vsel %vm1003, %v1095, 0
      %v1162 = vsel %vm1103, %v839, 0
      %1164 = vmatpush.bf16.msra.mxu0 0
      %1165 = vmatpush.bf16.msra.mxu0 0
      %1166 = vmatpush.bf16.msra.mxu0 0
      %1167 = vmatpush.bf16.msra.mxu0 0
      %1168 = vmatpush.bf16.msra.mxu0 0
      %1169 = vmatpush.bf16.msra.mxu0 0
      %1170 = vmatpush.bf16.msra.mxu0 0
      %1171 = vmatpush.bf16.msra.mxu0 %v1162
      %1172 = vmatmul.bf16.gmra.mxu0 %v1159
      %v1173 = vpop.f32.mrf.mxu0
      %v1174 = vadd.f32 0.0, %v1173
      %v1175 = vpop.f32.mrf.mxu0
      %1176 = vdwg.mxu0
      %v1178 = vsel %vm1003, %v1096, 0
      %v1181 = vsel %vm1103, %v840, 0
      %1183 = vmatpush.bf16.msra.mxu0 0
      %1184 = vmatpush.bf16.msra.mxu0 0
      %1185 = vmatpush.bf16.msra.mxu0 0
      %1186 = vmatpush.bf16.msra.mxu0 0
      %1187 = vmatpush.bf16.msra.mxu0 0
      %1188 = vmatpush.bf16.msra.mxu0 0
      %1189 = vmatpush.bf16.msra.mxu0 0
      %1190 = vmatpush.bf16.msra.mxu0 %v1181
      %1191 = vmatmul.bf16.gmra.mxu0 %v1178
      %v1192 = vpop.f32.mrf.mxu0
      %v1193 = vadd.f32 0.0, %v1192
      %v1194 = vpop.f32.mrf.mxu0
      %1195 = vdwg.mxu0
      %v1197 = vsel %vm1003, %v1097, 0
      %v1200 = vsel %vm1103, %v841, 0
      %1202 = vmatpush.bf16.msra.mxu0 0
      %1203 = vmatpush.bf16.msra.mxu0 0
      %1204 = vmatpush.bf16.msra.mxu0 0
      %1205 = vmatpush.bf16.msra.mxu0 0
      %1206 = vmatpush.bf16.msra.mxu0 0
      %1207 = vmatpush.bf16.msra.mxu0 0
      %1208 = vmatpush.bf16.msra.mxu0 0
      %1209 = vmatpush.bf16.msra.mxu0 %v1200
      %1210 = vmatmul.bf16.gmra.mxu0 %v1197
      %v1211 = vpop.f32.mrf.mxu0
      %v1212 = vadd.f32 0.0, %v1211
      %v1213 = vpop.f32.mrf.mxu0
      %1214 = vdwg.mxu0
      %v1216 = vsel %vm1003, %v1098, 0
      %v1219 = vsel %vm1103, %v842, 0
      %1221 = vmatpush.bf16.msra.mxu0 0
      %1222 = vmatpush.bf16.msra.mxu0 0
      %1223 = vmatpush.bf16.msra.mxu0 0
      %1224 = vmatpush.bf16.msra.mxu0 0
      %1225 = vmatpush.bf16.msra.mxu0 0
      %1226 = vmatpush.bf16.msra.mxu0 0
      %1227 = vmatpush.bf16.msra.mxu0 0
      %1228 = vmatpush.bf16.msra.mxu0 %v1219
      %1229 = vmatmul.bf16.gmra.mxu0 %v1216
      %v1230 = vpop.f32.mrf.mxu0
      %v1231 = vadd.f32 0.0, %v1230
      %v1232 = vpop.f32.mrf.mxu0
      %1233 = vdwg.mxu0
      %v1235 = vsel %vm1003, %v1099, 0
      %v1238 = vsel %vm1103, %v843, 0
      %1240 = vmatpush.bf16.msra.mxu0 0
      %1241 = vmatpush.bf16.msra.mxu0 0
      %1242 = vmatpush.bf16.msra.mxu0 0
      %1243 = vmatpush.bf16.msra.mxu0 0
      %1244 = vmatpush.bf16.msra.mxu0 0
      %1245 = vmatpush.bf16.msra.mxu0 0
      %1246 = vmatpush.bf16.msra.mxu0 0
      %1247 = vmatpush.bf16.msra.mxu0 %v1238
      %1248 = vmatmul.bf16.gmra.mxu0 %v1235
      %v1249 = vpop.f32.mrf.mxu0
      %v1250 = vadd.f32 0.0, %v1249
      %v1251 = vpop.f32.mrf.mxu0
      %1252 = vdwg.mxu0
      %1253 = vst.msk [vmem:[#allocation2] sm:$0xff] %vm850, %v1117
      %1254 = vst.msk [vmem:[#allocation2 + $0x8] sm:$0xff] %vm850, %v1136
      %1257 = vrot.lane.b32.xlu0 %v1155, 32
      %v1258 = vpop.permute.xlu0 %1257
      %1259 = vrot.lane.b32.xlu0 %v1174, 32
      %v1260 = vpop.permute.xlu0 %1259
      %vm1263 = vcmask 523520
      %1264 = vst.msk [vmem:[#allocation2] sm:$0xff] %vm1263, %v1258
      %1265 = vst.msk [vmem:[#allocation2 + $0x8] sm:$0xff] %vm1263, %v1260
      %1268 = vrot.lane.b32.xlu0 %v1193, 64
      %v1269 = vpop.permute.xlu0 %1268
      %1270 = vrot.lane.b32.xlu0 %v1212, 64
      %v1271 = vpop.permute.xlu0 %1270
      %vm1274 = vcmask 785920
      %1275 = vst.msk [vmem:[#allocation2] sm:$0xff] %vm1274, %v1269
      %1276 = vst.msk [vmem:[#allocation2 + $0x8] sm:$0xff] %vm1274, %v1271
      %1279 = vrot.lane.b32.xlu0 %v1231, 96
      %v1280 = vpop.permute.xlu0 %1279
      %1281 = vrot.lane.b32.xlu0 %v1250, 96
      %v1282 = vpop.permute.xlu0 %1281
      %vm1285 = vcmask 1048320
      %1286 = vst.msk [vmem:[#allocation2] sm:$0xff] %vm1285, %v1280
      %1287 = vst.msk [vmem:[#allocation2 + $0x8] sm:$0xff] %vm1285, %v1282
      %v1288 = vld [vmem:[#allocation2] sm:$0xff]
      %v1289 = vld [vmem:[#allocation2 + $0x8] sm:$0xff]
      %v1290 = vpack.c.bf16 %v1289, %v1288
      %v1291 = vld [vmem:[%s463] sm:$0xf]
      %v1292 = vld [vmem:[%s463 + $0x4] sm:$0xf]
      %v1293 = vld [vmem:[%s463 + $0x8] sm:$0xf]
      %v1294 = vld [vmem:[%s463 + $0xc] sm:$0xf]
      %v1295 = vld [vmem:[%s463 + $0x10] sm:$0xf]
      %v1296 = vld [vmem:[%s463 + $0x14] sm:$0xf]
      %v1297 = vld [vmem:[%s463 + $0x18] sm:$0xf]
      %v1298 = vld [vmem:[%s463 + $0x1c] sm:$0xf]
      %v1299 = vld [vmem:[%s463 + $0x20] sm:$0xf]
      %v1300 = vld [vmem:[%s463 + $0x24] sm:$0xf]
      %v1301 = vld [vmem:[%s463 + $0x28] sm:$0xf]
      %v1302 = vld [vmem:[%s463 + $0x2c] sm:$0xf]
      %v1303 = vld [vmem:[%s463 + $0x30] sm:$0xf]
      %v1304 = vld [vmem:[%s463 + $0x34] sm:$0xf]
      %v1305 = vld [vmem:[%s463 + $0x38] sm:$0xf]
      %v1306 = vld [vmem:[%s463 + $0x3c] sm:$0xf]
      %v1307 = vld [vmem:[%s466] sm:$0x1]
      %v1309 = vperm.slane %v1307, 0
      %v1327 = vunpack.c.l.b16 %v1291
      %v1328 = vunpack.c.l.b16 %v1292
      %v1329 = vunpack.c.l.b16 %v1293
      %v1330 = vunpack.c.l.b16 %v1294
      %v1331 = vunpack.c.l.b16 %v1295
      %v1332 = vunpack.c.l.b16 %v1296
      %v1333 = vunpack.c.l.b16 %v1297
      %v1334 = vunpack.c.l.b16 %v1298
      %v1335 = vunpack.c.l.b16 %v1299
      %v1336 = vunpack.c.l.b16 %v1300
      %v1337 = vunpack.c.l.b16 %v1301
      %v1338 = vunpack.c.l.b16 %v1302
      %v1339 = vunpack.c.l.b16 %v1303
      %v1340 = vunpack.c.l.b16 %v1304
      %v1341 = vunpack.c.l.b16 %v1305
      %v1342 = vunpack.c.l.b16 %v1306
      %v1343 = vpack.c.b16 %v1328, %v1327
      %v1344 = vpack.c.b16 %v1330, %v1329
      %v1345 = vpack.c.b16 %v1332, %v1331
      %v1346 = vpack.c.b16 %v1334, %v1333
      %v1347 = vpack.c.b16 %v1336, %v1335
      %v1348 = vpack.c.b16 %v1338, %v1337
      %v1349 = vpack.c.b16 %v1340, %v1339
      %v1350 = vpack.c.b16 %v1342, %v1341
      %1359 = vmatpush.bf16.msra.mxu0 %v1350
      %1360 = vmatpush.bf16.msra.mxu0 %v1349
      %1361 = vmatpush.bf16.msra.mxu0 %v1348
      %1362 = vmatpush.bf16.msra.mxu0 %v1347
      %1363 = vmatpush.bf16.msra.mxu0 %v1346
      %1364 = vmatpush.bf16.msra.mxu0 %v1345
      %1365 = vmatpush.bf16.msra.mxu0 %v1344
      %1366 = vmatpush.bf16.msra.mxu0 %v1343
      %1367 = vmatmul.bf16.gmra.mxu0 %v1290
      %v1368 = vpop.f32.mrf.mxu0
      %v1369 = vadd.f32 %v1309, %v1368
      %v1370 = vpop.f32.mrf.mxu0
      %v1371 = vadd.f32 %v1309, %v1370
      %1372 = vdwg.mxu0
      %v1373 = vadd.f32 %v1369, %v547
      %v1374 = vadd.f32 %v1371, %v548
      %1375 = vadd.xlane.f32.xlu0 %v1373
      %v1376 = vpop.xlane.xlu0 %1375
      %1377 = vadd.xlane.f32.xlu0 %v1374
      %v1378 = vpop.xlane.xlu0 %1377
      %v1379 = vmul.f32 %v1376, %v506
      %v1380 = vmul.f32 %v1378, %v506
      %v1381 = vsub.f32 %v1373, %v1379
      %v1382 = vsub.f32 %v1374, %v1380
      %v1383 = vmul.f32 %v1381, %v1381
      %v1384 = vmul.f32 %v1382, %v1382
      %1385 = vadd.xlane.f32.xlu0 %v1383
      %v1386 = vpop.xlane.xlu0 %1385
      %1387 = vadd.xlane.f32.xlu0 %v1384
      %v1388 = vpop.xlane.xlu0 %1387
      %v1389 = vmul.f32 %v1386, %v506
      %v1390 = vmul.f32 %v1388, %v506
      %v1391 = vadd.f32 %v1389, 1e-12
      %v1392 = vadd.f32 %v1390, 1e-12
      %v1393 = vrsqrt.pop %v1391
      %v1394 = vmul.f32 %v1393, %v1391
      %v1395 = vmul.f32 %v1394, %v1393
      %v1396 = vmul.f32 0.5, %v1395
      %v1397 = vsub.f32 1.5, %v1396
      %v1398 = vmul.f32 %v1393, %v1397
      %vm1399 = vweird.f32 %v1391
      %vm1400 = vweird.f32 %v1393
      %vm1401 = vmor %vm1399, %vm1400
      %v1402 = vsel %vm1401, %v1393, %v1398
      %v1403 = vrsqrt.pop %v1392
      %v1404 = vmul.f32 %v1403, %v1392
      %v1405 = vmul.f32 %v1404, %v1403
      %v1406 = vmul.f32 0.5, %v1405
      %v1407 = vsub.f32 1.5, %v1406
      %v1408 = vmul.f32 %v1403, %v1407
      %vm1409 = vweird.f32 %v1392
      %vm1410 = vweird.f32 %v1403
      %vm1411 = vmor %vm1409, %vm1410
      %v1412 = vsel %vm1411, %v1403, %v1408
      %v1413 = vmul.f32 %v1381, %v1402
      %v1414 = vmul.f32 %v1382, %v1412
      %v1415 = vperm.slane %v495, 2
      %v1416 = vmul.f32 %v1413, %v1415
      %v1417 = vmul.f32 %v1414, %v1415
      %v1418 = vperm.slane %v495, 3
      %v1419 = vadd.f32 %v1416, %v1418
      %v1420 = vadd.f32 %v1417, %v1418
      %v1421 = vpack.c.bf16 %v1420, %v1419
      %v1422 = vld [vmem:[%s471] sm:$0xff]
      %v1423 = vld [vmem:[%s471 + $0x8] sm:$0xff]
      %v1424 = vld [vmem:[%s471 + $0x10] sm:$0xff]
      %v1425 = vld [vmem:[%s471 + $0x18] sm:$0xff]
      %v1426 = vld [vmem:[%s471 + $0x20] sm:$0xff]
      %v1427 = vld [vmem:[%s471 + $0x28] sm:$0xff]
      %v1428 = vld [vmem:[%s471 + $0x30] sm:$0xff]
      %v1429 = vld [vmem:[%s471 + $0x38] sm:$0xff]
      %v1430 = vld [vmem:[%s471 + $0x40] sm:$0xff]
      %v1431 = vld [vmem:[%s471 + $0x48] sm:$0xff]
      %v1432 = vld [vmem:[%s471 + $0x50] sm:$0xff]
      %v1433 = vld [vmem:[%s471 + $0x58] sm:$0xff]
      %v1434 = vld [vmem:[%s471 + $0x60] sm:$0xff]
      %v1435 = vld [vmem:[%s471 + $0x68] sm:$0xff]
      %v1436 = vld [vmem:[%s471 + $0x70] sm:$0xff]
      %v1437 = vld [vmem:[%s471 + $0x78] sm:$0xff]
      %v1438 = vld [vmem:[%s475] sm:$0x3]
      %v1440 = vperm.slane %v1438, 0
      %v1441 = vperm.slane %v1438, 1
      %v1460 = vunpack.c.l.b16 %v1422
      %v1461 = vunpack.c.h.b16 %v1422
      %v1462 = vunpack.c.l.b16 %v1423
      %v1463 = vunpack.c.h.b16 %v1423
      %v1464 = vunpack.c.l.b16 %v1424
      %v1465 = vunpack.c.h.b16 %v1424
      %v1466 = vunpack.c.l.b16 %v1425
      %v1467 = vunpack.c.h.b16 %v1425
      %v1468 = vunpack.c.l.b16 %v1426
      %v1469 = vunpack.c.h.b16 %v1426
      %v1470 = vunpack.c.l.b16 %v1427
      %v1471 = vunpack.c.h.b16 %v1427
      %v1472 = vunpack.c.l.b16 %v1428
      %v1473 = vunpack.c.h.b16 %v1428
      %v1474 = vunpack.c.l.b16 %v1429
      %v1475 = vunpack.c.h.b16 %v1429
      %v1476 = vunpack.c.l.b16 %v1430
      %v1477 = vunpack.c.h.b16 %v1430
      %v1478 = vunpack.c.l.b16 %v1431
      %v1479 = vunpack.c.h.b16 %v1431
      %v1480 = vunpack.c.l.b16 %v1432
      %v1481 = vunpack.c.h.b16 %v1432
      %v1482 = vunpack.c.l.b16 %v1433
      %v1483 = vunpack.c.h.b16 %v1433
      %v1484 = vunpack.c.l.b16 %v1434
      %v1485 = vunpack.c.h.b16 %v1434
      %v1486 = vunpack.c.l.b16 %v1435
      %v1487 = vunpack.c.h.b16 %v1435
      %v1488 = vunpack.c.l.b16 %v1436
      %v1489 = vunpack.c.h.b16 %v1436
      %v1490 = vunpack.c.l.b16 %v1437
      %v1491 = vunpack.c.h.b16 %v1437
      %v1492 = vpack.c.b16 %v1462, %v1460
      %v1493 = vpack.c.b16 %v1463, %v1461
      %v1494 = vpack.c.b16 %v1466, %v1464
      %v1495 = vpack.c.b16 %v1467, %v1465
      %v1496 = vpack.c.b16 %v1470, %v1468
      %v1497 = vpack.c.b16 %v1471, %v1469
      %v1498 = vpack.c.b16 %v1474, %v1472
      %v1499 = vpack.c.b16 %v1475, %v1473
      %v1500 = vpack.c.b16 %v1478, %v1476
      %v1501 = vpack.c.b16 %v1479, %v1477
      %v1502 = vpack.c.b16 %v1482, %v1480
      %v1503 = vpack.c.b16 %v1483, %v1481
      %v1504 = vpack.c.b16 %v1486, %v1484
      %v1505 = vpack.c.b16 %v1487, %v1485
      %v1506 = vpack.c.b16 %v1490, %v1488
      %v1507 = vpack.c.b16 %v1491, %v1489
      %1524 = vmatpush.bf16.msra.mxu0 %v1506
      %1525 = vmatpush.bf16.msra.mxu0 %v1504
      %1526 = vmatpush.bf16.msra.mxu0 %v1502
      %1527 = vmatpush.bf16.msra.mxu0 %v1500
      %1528 = vmatpush.bf16.msra.mxu0 %v1498
      %1529 = vmatpush.bf16.msra.mxu0 %v1496
      %1530 = vmatpush.bf16.msra.mxu0 %v1494
      %1531 = vmatpush.bf16.msra.mxu0 %v1492
      %1532 = vmatmul.bf16.gmra.mxu0 %v1421
      %v1533 = vpop.f32.mrf.mxu0
      %v1534 = vadd.f32 %v1440, %v1533
      %v1535 = vpop.f32.mrf.mxu0
      %v1536 = vadd.f32 %v1440, %v1535
      %1537 = vdwg.mxu0
      %1538 = vmatpush.bf16.msra.mxu0 %v1507
      %1539 = vmatpush.bf16.msra.mxu0 %v1505
      %1540 = vmatpush.bf16.msra.mxu0 %v1503
      %1541 = vmatpush.bf16.msra.mxu0 %v1501
      %1542 = vmatpush.bf16.msra.mxu0 %v1499
      %1543 = vmatpush.bf16.msra.mxu0 %v1497
      %1544 = vmatpush.bf16.msra.mxu0 %v1495
      %1545 = vmatpush.bf16.msra.mxu0 %v1493
      %1546 = vmatmul.bf16.gmra.mxu0 %v1421
      %v1547 = vpop.f32.mrf.mxu0
      %v1548 = vadd.f32 %v1441, %v1547
      %v1549 = vpop.f32.mrf.mxu0
      %v1550 = vadd.f32 %v1441, %v1549
      %1551 = vdwg.mxu0
      %v1552 = vmax.f32 %v1534, 0.0
      %v1553 = vmax.f32 %v1548, 0.0
      %v1554 = vmax.f32 %v1536, 0.0
      %v1555 = vmax.f32 %v1550, 0.0
      %v1556 = vpack.c.bf16 %v1554, %v1552
      %v1557 = vpack.c.bf16 %v1555, %v1553
      %v1558 = vld [vmem:[%s480] sm:$0xf]
      %v1559 = vld [vmem:[%s480 + $0x4] sm:$0xf]
      %v1560 = vld [vmem:[%s480 + $0x8] sm:$0xf]
      %v1561 = vld [vmem:[%s480 + $0xc] sm:$0xf]
      %v1562 = vld [vmem:[%s480 + $0x10] sm:$0xf]
      %v1563 = vld [vmem:[%s480 + $0x14] sm:$0xf]
      %v1564 = vld [vmem:[%s480 + $0x18] sm:$0xf]
      %v1565 = vld [vmem:[%s480 + $0x1c] sm:$0xf]
      %v1566 = vld [vmem:[%s480 + $0x20] sm:$0xf]
      %v1567 = vld [vmem:[%s480 + $0x24] sm:$0xf]
      %v1568 = vld [vmem:[%s480 + $0x28] sm:$0xf]
      %v1569 = vld [vmem:[%s480 + $0x2c] sm:$0xf]
      %v1570 = vld [vmem:[%s480 + $0x30] sm:$0xf]
      %v1571 = vld [vmem:[%s480 + $0x34] sm:$0xf]
      %v1572 = vld [vmem:[%s480 + $0x38] sm:$0xf]
      %v1573 = vld [vmem:[%s480 + $0x3c] sm:$0xf]
      %v1574 = vld [vmem:[%s480 + $0x40] sm:$0xf]
      %v1575 = vld [vmem:[%s480 + $0x44] sm:$0xf]
      %v1576 = vld [vmem:[%s480 + $0x48] sm:$0xf]
      %v1577 = vld [vmem:[%s480 + $0x4c] sm:$0xf]
      %v1578 = vld [vmem:[%s480 + $0x50] sm:$0xf]
      %v1579 = vld [vmem:[%s480 + $0x54] sm:$0xf]
      %v1580 = vld [vmem:[%s480 + $0x58] sm:$0xf]
      %v1581 = vld [vmem:[%s480 + $0x5c] sm:$0xf]
      %v1582 = vld [vmem:[%s480 + $0x60] sm:$0xf]
      %v1583 = vld [vmem:[%s480 + $0x64] sm:$0xf]
      %v1584 = vld [vmem:[%s480 + $0x68] sm:$0xf]
      %v1585 = vld [vmem:[%s480 + $0x6c] sm:$0xf]
      %v1586 = vld [vmem:[%s480 + $0x70] sm:$0xf]
      %v1587 = vld [vmem:[%s480 + $0x74] sm:$0xf]
      %v1588 = vld [vmem:[%s480 + $0x78] sm:$0xf]
      %v1589 = vld [vmem:[%s480 + $0x7c] sm:$0xf]
      %v1590 = vld [vmem:[%s483] sm:$0x1]
      %v1592 = vperm.slane %v1590, 0
      %v1626 = vunpack.c.l.b16 %v1558
      %v1627 = vunpack.c.l.b16 %v1559
      %v1628 = vunpack.c.l.b16 %v1560
      %v1629 = vunpack.c.l.b16 %v1561
      %v1630 = vunpack.c.l.b16 %v1562
      %v1631 = vunpack.c.l.b16 %v1563
      %v1632 = vunpack.c.l.b16 %v1564
      %v1633 = vunpack.c.l.b16 %v1565
      %v1634 = vunpack.c.l.b16 %v1566
      %v1635 = vunpack.c.l.b16 %v1567
      %v1636 = vunpack.c.l.b16 %v1568
      %v1637 = vunpack.c.l.b16 %v1569
      %v1638 = vunpack.c.l.b16 %v1570
      %v1639 = vunpack.c.l.b16 %v1571
      %v1640 = vunpack.c.l.b16 %v1572
      %v1641 = vunpack.c.l.b16 %v1573
      %v1642 = vunpack.c.l.b16 %v1574
      %v1643 = vunpack.c.l.b16 %v1575
      %v1644 = vunpack.c.l.b16 %v1576
      %v1645 = vunpack.c.l.b16 %v1577
      %v1646 = vunpack.c.l.b16 %v1578
      %v1647 = vunpack.c.l.b16 %v1579
      %v1648 = vunpack.c.l.b16 %v1580
      %v1649 = vunpack.c.l.b16 %v1581
      %v1650 = vunpack.c.l.b16 %v1582
      %v1651 = vunpack.c.l.b16 %v1583
      %v1652 = vunpack.c.l.b16 %v1584
      %v1653 = vunpack.c.l.b16 %v1585
      %v1654 = vunpack.c.l.b16 %v1586
      %v1655 = vunpack.c.l.b16 %v1587
      %v1656 = vunpack.c.l.b16 %v1588
      %v1657 = vunpack.c.l.b16 %v1589
      %v1658 = vpack.c.b16 %v1627, %v1626
      %v1659 = vpack.c.b16 %v1629, %v1628
      %v1660 = vpack.c.b16 %v1631, %v1630
      %v1661 = vpack.c.b16 %v1633, %v1632
      %v1662 = vpack.c.b16 %v1635, %v1634
      %v1663 = vpack.c.b16 %v1637, %v1636
      %v1664 = vpack.c.b16 %v1639, %v1638
      %v1665 = vpack.c.b16 %v1641, %v1640
      %v1666 = vpack.c.b16 %v1643, %v1642
      %v1667 = vpack.c.b16 %v1645, %v1644
      %v1668 = vpack.c.b16 %v1647, %v1646
      %v1669 = vpack.c.b16 %v1649, %v1648
      %v1670 = vpack.c.b16 %v1651, %v1650
      %v1671 = vpack.c.b16 %v1653, %v1652
      %v1672 = vpack.c.b16 %v1655, %v1654
      %v1673 = vpack.c.b16 %v1657, %v1656
      %1690 = vmatpush.bf16.msra.mxu0 %v1665
      %1691 = vmatpush.bf16.msra.mxu0 %v1664
      %1692 = vmatpush.bf16.msra.mxu0 %v1663
      %1693 = vmatpush.bf16.msra.mxu0 %v1662
      %1694 = vmatpush.bf16.msra.mxu0 %v1661
      %1695 = vmatpush.bf16.msra.mxu0 %v1660
      %1696 = vmatpush.bf16.msra.mxu0 %v1659
      %1697 = vmatpush.bf16.msra.mxu0 %v1658
      %1698 = vmatmul.bf16.gmra.mxu0 %v1556
      %v1699 = vpop.f32.mrf.mxu0
      %v1700 = vadd.f32 %v1592, %v1699
      %v1701 = vpop.f32.mrf.mxu0
      %v1702 = vadd.f32 %v1592, %v1701
      %1703 = vdwg.mxu0
      %1704 = vmatpush.bf16.msra.mxu0 %v1673
      %1705 = vmatpush.bf16.msra.mxu0 %v1672
      %1706 = vmatpush.bf16.msra.mxu0 %v1671
      %1707 = vmatpush.bf16.msra.mxu0 %v1670
      %1708 = vmatpush.bf16.msra.mxu0 %v1669
      %1709 = vmatpush.bf16.msra.mxu0 %v1668
      %1710 = vmatpush.bf16.msra.mxu0 %v1667
      %1711 = vmatpush.bf16.msra.mxu0 %v1666
      %1712 = vmatmul.bf16.gmra.mxu0 %v1557
      %v1713 = vpop.f32.mrf.mxu0
      %v1714 = vadd.f32 %v1700, %v1713
      %v1715 = vpop.f32.mrf.mxu0
      %v1716 = vadd.f32 %v1702, %v1715
      %1717 = vdwg.mxu0
      %v1718 = vadd.f32 %v1714, %v1419
      %v1719 = vadd.f32 %v1716, %v1420
      %1720 = vst [vmem:[%s10] sm:$0xff] %v1718
      %1721 = vst [vmem:[%s10 + $0x8] sm:$0xff] %v1719
      // Predicated region
      $region65: #{transformer_lm_forward.2} parent=59 // pred_check
        %p1722 = pneg %p289
      $region66: #{transformer_lm_forward.2} parent=59 // pred_check_branch
        %1724 = sbr.rel (%p1722) target = $region68
      $region67: #{transformer_lm_forward.2} parent=59 // pred_region
        _
      $region68: #{transformer_lm_forward.2} parent=59 // pred_fallthru
        _
      // Predicated region
      $region69: #{transformer_lm_forward.2} parent=59 // pred_check
        %p1725 = pneg %p289
      $region70: #{transformer_lm_forward.2} parent=59 // pred_check_branch
        %1727 = sbr.rel (%p1725) target = $region72
      $region71: #{transformer_lm_forward.2} parent=59 // pred_region
        _
      $region72: #{transformer_lm_forward.2} parent=59 // pred_fallthru
        _
    $region60: #{transformer_lm_forward.2} parent=5 // pred_fallthru
      _
    %p1728 = scmp.le.s32.totalorder 2, %s16
    // Predicated region
    $region73: #{transformer_lm_forward.2} parent=5 // pred_check
      %p1729 = pneg %p1728
    $region74: #{transformer_lm_forward.2} parent=5 // pred_check_branch
      %1731 = sbr.rel (%p1729) target = $region76
    $region75: #{transformer_lm_forward.2} parent=5 // pred_region
      %s1732 = ssub.s32 %s16, 2
    $region76: #{transformer_lm_forward.2} parent=5 // pred_fallthru
      _
  $region6: #{transformer_lm_forward.2} parent=0 // loop_footer
    %s20 = sadd.s32 1, %s16
  $region7: #{transformer_lm_forward.2} parent=0 // loop_footer_branch
    %15 = sbr.rel target = $region3
  $region8: #{transformer_lm_forward.2} parent=0 // loop_exit
    _

</llo_original>
